<compile_context>
chip_gen: v6e
topology: v6e:2x2x1
jax: 0.10.0
libtpu: 0.0.40
codegen_flags: <defaults>
</compile_context>

<pallas_src>
import functools

import jax
import jax.numpy as jnp
from jax.experimental import pallas as pl
from jax.experimental.pallas import tpu as pltpu

EPS = 1e-5  # PyTorch LayerNorm default


def _round_up(n, m):
    return ((n + m - 1) // m) * m


def _layer_norm(v, w, b):
    # f32 elementwise math (v5e VPU/EUP have no bf16).
    mu = jnp.mean(v, axis=-1, keepdims=True)
    var = jnp.mean((v - mu) ** 2, axis=-1, keepdims=True)
    return (v - mu) * jax.lax.rsqrt(var + EPS) * w + b


_LAYER_PARAM_ORDER = ["ln1w", "ln1b", "w_in", "b_in", "wo", "bo",
                      "ln2w", "ln2b", "w1", "b1", "w2", "b2"]


# --------------------------------------------------------------------------
# All CLIP ResidualAttentionBlocks fused into one kernel.
# Grid = (B // TB, num_layers).  The residual stream of the current batch
# tile lives in a flattened (TB*L, D) VMEM scratch across the layer axis.
# --------------------------------------------------------------------------
def _transformer_kernel(x_ref, mask_ref,
                        ln1w, ln1b, w_in, b_in, wo, bo,
                        ln2w, ln2b, w1, b1, w2, b2,
                        o_ref, resid_ref, *, num_heads, mlp_chunk):
    layer = pl.program_id(1)
    TB, L, D = x_ref.shape
    H = num_heads
    hd = D // H
    R = TB * L

    # First layer for this batch tile: pull embeddings into the resident
    # residual scratch (flattened so M = TB*L for every projection matmul).
    @pl.when(layer == 0)
    def _():
        resid_ref[...] = x_ref[...].reshape(R, D)

    xf = resid_ref[...]                                         # (R, D) f32

    # ---- attention branch (pre-LN, fused QKV projection) ----
    x1 = _layer_norm(xf, ln1w[...], ln1b[...])
    # 1/sqrt(hd) is already folded into the Q columns of w_in / b_in.
    qkv = (jnp.dot(x1.astype(jnp.bfloat16), w_in[...],
                   preferred_element_type=jnp.float32)
           + b_in[...]).astype(jnp.bfloat16)                    # (R, 3D) bf16

    # One layout transform (static lane slices + leading-axis stack) to a
    # head-major layout, then head-batched einsums — no per-head matmuls.
    def head_major(base):
        return jnp.stack(
            [qkv[:, base + h * hd: base + (h + 1) * hd].reshape(TB, L, hd)
             for h in range(H)], axis=0).reshape(H * TB, L, hd)

    q = head_major(0)
    k = head_major(D)
    v = head_major(2 * D)

    s = jnp.einsum('bqd,bkd->bqk', q, k,
                   preferred_element_type=jnp.float32)          # (H*TB, L, L)
    s = s + mask_ref[...][None, :, :]
    s = s - jnp.max(s, axis=-1, keepdims=True)
    p = jnp.exp(s)
    p = p * pl.reciprocal(jnp.sum(p, axis=-1, keepdims=True), approx=True)
    o = jnp.einsum('bqk,bkd->bqd', p.astype(jnp.bfloat16), v,
                   preferred_element_type=jnp.float32)          # (H*TB, L, hd)

    # Merge heads back to (R, D) (bf16, it is only consumed by the out-proj).
    o3 = o.astype(jnp.bfloat16).reshape(H, R, hd)
    o_cat = jnp.concatenate([o3[h] for h in range(H)], axis=-1)  # (R, D)
    attn = jnp.dot(o_cat, wo[...],
                   preferred_element_type=jnp.float32) + bo[...]
    resid_ref[...] = xf + attn

    # ---- MLP branch (QuickGELU), row-chunked to bound the f32 live set ----
    def mlp_rows(xc):
        x2 = _layer_norm(xc, ln2w[...], ln2b[...])
        h1 = jnp.dot(x2.astype(jnp.bfloat16), w1[...],
                     preferred_element_type=jnp.float32) + b1[...]
        # TODO(synk): compute QuickGELU in bf16 on v6e/v7x (bf16 VPU/EUP);
        # kept f32 here so the same kernel is accurate on v5e.
        g = h1 * jax.nn.sigmoid(1.702 * h1)
        return jnp.dot(g.astype(jnp.bfloat16), w2[...],
                       preferred_element_type=jnp.float32) + b2[...]

    n_chunks = R // mlp_chunk
    if n_chunks <= 1:
        xc = resid_ref[...]
        resid_ref[...] = xc + mlp_rows(xc)
    else:
        @pl.loop(0, n_chunks)
        def _(c):
            r0 = pl.multiple_of(c * mlp_chunk, mlp_chunk)
            xc = resid_ref[pl.ds(r0, mlp_chunk), :]
            resid_ref[pl.ds(r0, mlp_chunk), :] = xc + mlp_rows(xc)

    # Last layer: emit the batch tile (HBM writeback happens once per batch
    # tile, when the output block index changes).
    @pl.when(layer == pl.num_programs(1) - 1)
    def _():
        o_ref[...] = resid_ref[...].reshape(TB, L, D)


def _pick_tb(B, max_tb=8):
    # Largest divisor of B that is <= max_tb (M = TB*L per projection matmul).
    # TODO(synk): pad B (and prefer an even number of batch tiles) to keep
    # v7x's two TensorCores balanced for awkward batch sizes.
    for tb in range(min(max_tb, B), 0, -1):
        if B % tb == 0:
            return tb
    return 1


def _pick_mlp_chunk(rows, target=512):
    # Largest sublane-aligned divisor of `rows` that is <= target, so the
    # MLP's h1 / QuickGELU intermediates live only a few MB at a time.
    if rows <= target:
        return rows
    for c in range(target, 7, -1):
        if rows % c == 0 and c % 8 == 0:
            return c
    return rows


def _vmem_limit_bytes():
    # Physical VMEM minus headroom for compiler-internal scratch/semaphores
    # (v7x: 64 MiB -> ~56 MiB; v5e/v6e: 128 MiB -> ~120 MiB).
    try:
        cap = int(pltpu.get_tpu_info().vmem_capacity_bytes)
    except Exception:
        cap = 64 * 1024 * 1024
    return max(cap - 8 * 1024 * 1024, 32 * 1024 * 1024)


def _stack_and_fold(layers, num_heads):
    """Stack per-layer params to (num_layers, ...) and fold 1/sqrt(hd) into Q."""
    stacked = {n: jnp.stack([lp[n] for lp in layers], axis=0)
               for n in _LAYER_PARAM_ORDER}
    D = stacked["wo"].shape[1]
    hd = D // num_heads
    scale = float(hd) ** -0.5
    stacked["w_in"] = stacked["w_in"].at[..., :D].multiply(scale)
    stacked["b_in"] = stacked["b_in"].at[..., :D].multiply(scale)
    return stacked


def transformer_forward(x, mask, stacked, num_heads, tb, mlp_chunk):
    B, L, D = x.shape
    num_layers = stacked["w_in"].shape[0]
    weights = [stacked[n] for n in _LAYER_PARAM_ORDER]

    in_specs = [pl.BlockSpec((tb, L, D), lambda b, l: (b, 0, 0)),
                pl.BlockSpec(mask.shape, lambda b, l: (0, 0))]
    for w in weights:
        nd = w.ndim - 1
        in_specs.append(pl.BlockSpec((None,) + w.shape[1:],
                                     lambda b, l, nd=nd: (l,) + (0,) * nd))

    kern = functools.partial(_transformer_kernel, num_heads=num_heads,
                             mlp_chunk=mlp_chunk)
    return pl.pallas_call(
        kern,
        out_shape=jax.ShapeDtypeStruct((B, L, D), jnp.float32),
        grid=(B // tb, num_layers),
        in_specs=in_specs,
        out_specs=pl.BlockSpec((tb, L, D), lambda b, l: (b, 0, 0)),
        scratch_shapes=[pltpu.VMEM((tb * L, D), jnp.float32)],
        compiler_params=pltpu.CompilerParams(
            dimension_semantics=("parallel", "arbitrary"),
            vmem_limit_bytes=_vmem_limit_bytes()),
    )(x, mask, *weights)


# --------------------------------------------------------------------------
# ln_final + text_projection on the already-gathered EOT rows:
# one dense (B, D) @ (D, P) step.
# --------------------------------------------------------------------------
def _final_kernel(x_ref, lnw, lnb, proj, o_ref):
    r = _layer_norm(x_ref[...], lnw[...], lnb[...])
    o_ref[...] = jnp.dot(r.astype(jnp.bfloat16), proj[...],
                         preferred_element_type=jnp.float32)


def final_projection(x_eot, lnw, lnb, proj):
    B, D = x_eot.shape
    P = proj.shape[1]
    return pl.pallas_call(
        _final_kernel,
        out_shape=jax.ShapeDtypeStruct((B, P), jnp.float32),
    )(x_eot, lnw, lnb, proj)


# --------------------------------------------------------------------------
# Full TextEncoder forward.
# --------------------------------------------------------------------------
def text_encoder_forward(tokens, params):
    # token_embedding(tokenized_prompts) + positional_embedding  (JAX glue).
    x = params["token_embedding"][tokens].astype(jnp.float32)            # (B, L, D)
    x = x + params["positional_embedding"][None].astype(jnp.float32)
    B, L, D = x.shape

    # Pad the sequence dim only to a sublane-friendly multiple of 16
    # (77 -> 80 for real CLIP); padded keys are masked below, padded query
    # rows are never read back.
    L_pad = _round_up(L, 16)
    if L_pad != L:
        x = jnp.pad(x, ((0, 0), (0, L_pad - L), (0, 0)))

    # Causal mask + key-padding mask, built once and shared by every layer.
    row = jnp.arange(L_pad)[:, None]
    col = jnp.arange(L_pad)[None, :]
    mask = jnp.where((col <= row) & (col < L), 0.0, -1e30).astype(jnp.float32)

    tb = _pick_tb(B)
    mlp_chunk = _pick_mlp_chunk(tb * L_pad)
    stacked = _stack_and_fold(params["layers"], params["num_heads"])
    x = transformer_forward(x, mask, stacked, params["num_heads"], tb, mlp_chunk)

    # x[arange(B), tokens.argmax(-1)]  ->  ln_final  ->  @ text_projection
    # NOTE: assumes (as CLIP's tokenizer guarantees) that EOT is the maximal
    # vocabulary id.
    eot = jnp.argmax(tokens, axis=-1)
    x_eot = x[jnp.arange(B), eot]                                        # (B, D) gather (JAX glue)
    return final_projection(x_eot, params["lnfw"], params["lnfb"],
                            params["text_projection"])


def init_params(key, vocab, L, D, num_heads, num_layers, proj_dim):
    keys = jax.random.split(key, 3 + num_layers)
    params = {
        "token_embedding": jax.random.normal(keys[0], (vocab, D), jnp.float32) * 0.02,
        "positional_embedding": jax.random.normal(keys[1], (L, D), jnp.float32) * 0.01,
        "lnfw": jnp.ones((1, D), jnp.float32),
        "lnfb": jnp.zeros((1, D), jnp.float32),
        # matmul weights live in bf16 (MXU-native, half the HBM/VMEM traffic).
        "text_projection": (jax.random.normal(keys[2], (D, proj_dim), jnp.float32)
                            * D ** -0.5).astype(jnp.bfloat16),
        "num_heads": num_heads,
        "layers": [],
    }
    for i in range(num_layers):
        k = jax.random.split(keys[3 + i], 6)
        wq = jax.random.normal(k[0], (D, D), jnp.float32) * 0.02
        wk = jax.random.normal(k[1], (D, D), jnp.float32) * 0.02
        wv = jax.random.normal(k[2], (D, D), jnp.float32) * 0.02
        params["layers"].append({
            "ln1w": jnp.ones((1, D), jnp.float32), "ln1b": jnp.zeros((1, D), jnp.float32),
            # CLIP-style fused in_proj: single (D, 3D) weight + (1, 3D) bias.
            "w_in": jnp.concatenate([wq, wk, wv], axis=1).astype(jnp.bfloat16),
            "b_in": jnp.zeros((1, 3 * D), jnp.float32),
            "wo": (jax.random.normal(k[3], (D, D), jnp.float32) * 0.02).astype(jnp.bfloat16),
            "bo": jnp.zeros((1, D), jnp.float32),
            "ln2w": jnp.ones((1, D), jnp.float32), "ln2b": jnp.zeros((1, D), jnp.float32),
            "w1": (jax.random.normal(k[4], (D, 4 * D), jnp.float32) * 0.02).astype(jnp.bfloat16),
            "b1": jnp.zeros((1, 4 * D), jnp.float32),
            "w2": (jax.random.normal(k[5], (4 * D, D), jnp.float32) * 0.02).astype(jnp.bfloat16),
            "b2": jnp.zeros((1, D), jnp.float32),
        })
    return params


if __name__ == "__main__":
    B, L, D, H, LAYERS, VOCAB, P = 2, 8, 32, 4, 2, 64, 32
    key = jax.random.PRNGKey(0)
    pk, tk = jax.random.split(key)
    params = init_params(pk, VOCAB, L, D, H, LAYERS, P)

    # Synthetic tokenized prompts: ids in [1, VOCAB-2], EOT token (= VOCAB-1,
    # the maximal id, as in CLIP) at a per-sequence position, zeros after.
    body = jax.random.randint(tk, (B, L), 1, VOCAB - 1)
    eot_pos = jnp.array([5, 3])
    col = jnp.arange(L)[None, :]
    tokens = jnp.where(col == eot_pos[:, None], VOCAB - 1,
                       jnp.where(col > eot_pos[:, None], 0, body)).astype(jnp.int32)

    out = text_encoder_forward(tokens, params)
    out = jax.block_until_ready(out)
    assert out.shape == (B, P) and out.dtype == jnp.float32
    assert bool(jnp.all(jnp.isfinite(out)))
    print("KERNEL_OK")
</pallas_src>

<mosaic_0001>
module attributes {stable_mosaic.version = 11 : i64} {
  func.func @_transformer_kernel(%arg0: i32, %arg1: i32, %arg2: memref<2x16x32xf32, #tpu.memory_space<vmem>>, %arg3: memref<16x16xf32, #tpu.memory_space<vmem>>, %arg4: memref<1x1x32xf32, #tpu.memory_space<vmem>>, %arg5: memref<1x1x32xf32, #tpu.memory_space<vmem>>, %arg6: memref<1x32x96xbf16, #tpu.memory_space<vmem>>, %arg7: memref<1x1x96xf32, #tpu.memory_space<vmem>>, %arg8: memref<1x32x32xbf16, #tpu.memory_space<vmem>>, %arg9: memref<1x1x32xf32, #tpu.memory_space<vmem>>, %arg10: memref<1x1x32xf32, #tpu.memory_space<vmem>>, %arg11: memref<1x1x32xf32, #tpu.memory_space<vmem>>, %arg12: memref<1x32x128xbf16, #tpu.memory_space<vmem>>, %arg13: memref<1x1x128xf32, #tpu.memory_space<vmem>>, %arg14: memref<1x128x32xbf16, #tpu.memory_space<vmem>>, %arg15: memref<1x1x32xf32, #tpu.memory_space<vmem>>, %arg16: memref<2x16x32xf32, #tpu.memory_space<vmem>>, %arg17: memref<32x32xf32, #tpu.memory_space<vmem>>) attributes {dimension_semantics = [#tpu.dimension_semantics<parallel>, #tpu.dimension_semantics<arbitrary>], iteration_bounds = array<i64: 1, 2>, scalar_prefetch = 0 : i64, scratch_operands = 1 : i64, tpu.core_type = #tpu.core_type<tc>, window_params = [{transform_indices = @transform_0, window_bounds = array<i64: 2, 16, 32>}, {pipeline_mode = #tpu.pipeline_mode<synchronous>, transform_indices = @transform_1, window_bounds = array<i64: 16, 16>}, {transform_indices = @transform_2, window_bounds = array<i64: 1, 1, 32>}, {transform_indices = @transform_3, window_bounds = array<i64: 1, 1, 32>}, {transform_indices = @transform_4, window_bounds = array<i64: 1, 32, 96>}, {transform_indices = @transform_5, window_bounds = array<i64: 1, 1, 96>}, {transform_indices = @transform_6, window_bounds = array<i64: 1, 32, 32>}, {transform_indices = @transform_7, window_bounds = array<i64: 1, 1, 32>}, {transform_indices = @transform_8, window_bounds = array<i64: 1, 1, 32>}, {transform_indices = @transform_9, window_bounds = array<i64: 1, 1, 32>}, {transform_indices = @transform_10, window_bounds = array<i64: 1, 32, 128>}, {transform_indices = @transform_11, window_bounds = array<i64: 1, 1, 128>}, {transform_indices = @transform_12, window_bounds = array<i64: 1, 128, 32>}, {transform_indices = @transform_13, window_bounds = array<i64: 1, 1, 32>}, {transform_indices = @transform_14, window_bounds = array<i64: 2, 16, 32>}]} {
    %c0_i32 = arith.constant 0 : i32
    %0 = arith.cmpi eq, %arg1, %c0_i32 : i32
    %1 = arith.extui %0 : i1 to i32
    %c0_i32_0 = arith.constant 0 : i32
    %2 = arith.cmpi ne, %1, %c0_i32_0 : i32
    scf.if %2 {
      %c0_66 = arith.constant 0 : index
      %c0_67 = arith.constant 0 : index
      %c0_68 = arith.constant 0 : index
      %174 = vector.load %arg2[%c0_66, %c0_67, %c0_68] : memref<2x16x32xf32, #tpu.memory_space<vmem>>, vector<2x16x32xf32>
      %175 = vector.shape_cast %174 : vector<2x16x32xf32> to vector<32x32xf32>
      %c0_69 = arith.constant 0 : index
      %c0_70 = arith.constant 0 : index
      %176 = vector.load %arg17[%c0_69, %c0_70] : memref<32x32xf32, #tpu.memory_space<vmem>>, vector<32x32xf32>
      tpu.vector_store %arg17[%c0_69, %c0_70], %175 {strides = array<i32>} : memref<32x32xf32, #tpu.memory_space<vmem>>, vector<32x32xf32>,
    } else {
    }
    %c0 = arith.constant 0 : index
    %c0_1 = arith.constant 0 : index
    %3 = vector.load %arg17[%c0, %c0_1] : memref<32x32xf32, #tpu.memory_space<vmem>>, vector<32x32xf32>
    %c0_2 = arith.constant 0 : index
    %c0_3 = arith.constant 0 : index
    %c0_4 = arith.constant 0 : index
    %4 = vector.load %arg4[%c0_2, %c0_3, %c0_4] : memref<1x1x32xf32, #tpu.memory_space<vmem>>, vector<1x1x32xf32>
    %5 = vector.shape_cast %4 : vector<1x1x32xf32> to vector<1x32xf32>
    %c0_5 = arith.constant 0 : index
    %c0_6 = arith.constant 0 : index
    %c0_7 = arith.constant 0 : index
    %6 = vector.load %arg5[%c0_5, %c0_6, %c0_7] : memref<1x1x32xf32, #tpu.memory_space<vmem>>, vector<1x1x32xf32>
    %7 = vector.shape_cast %6 : vector<1x1x32xf32> to vector<1x32xf32>
    %cst = arith.constant dense<0.000000e+00> : vector<32xf32>
    %8 = vector.multi_reduction <add>, %3, %cst [1] : vector<32x32xf32> to vector<32xf32>
    %9 = vector.shape_cast %8 : vector<32xf32> to vector<32x1xf32>
    %cst_8 = arith.constant 3.200000e+01 : f32
    %10 = vector.broadcast %cst_8 : f32 to vector<32x1xf32>
    %11 = arith.divf %9, %10 : vector<32x1xf32>
    %12 = vector.broadcast %11 : vector<32x1xf32> to vector<32x32xf32>
    %13 = arith.subf %3, %12 : vector<32x32xf32>
    %14 = arith.mulf %13, %13 : vector<32x32xf32>
    %cst_9 = arith.constant dense<0.000000e+00> : vector<32xf32>
    %15 = vector.multi_reduction <add>, %14, %cst_9 [1] : vector<32x32xf32> to vector<32xf32>
    %16 = vector.shape_cast %15 : vector<32xf32> to vector<32x1xf32>
    %cst_10 = arith.constant 3.200000e+01 : f32
    %17 = vector.broadcast %cst_10 : f32 to vector<32x1xf32>
    %18 = arith.divf %16, %17 : vector<32x1xf32>
    %19 = vector.broadcast %11 : vector<32x1xf32> to vector<32x32xf32>
    %20 = arith.subf %3, %19 : vector<32x32xf32>
    %cst_11 = arith.constant 9.99999974E-6 : f32
    %21 = vector.broadcast %cst_11 : f32 to vector<32x1xf32>
    %22 = arith.addf %18, %21 : vector<32x1xf32>
    %23 = math.rsqrt %22 : vector<32x1xf32>
    %24 = vector.broadcast %23 : vector<32x1xf32> to vector<32x32xf32>
    %25 = arith.mulf %20, %24 : vector<32x32xf32>
    %26 = vector.broadcast %5 : vector<1x32xf32> to vector<32x32xf32>
    %27 = arith.mulf %25, %26 : vector<32x32xf32>
    %28 = vector.broadcast %7 : vector<1x32xf32> to vector<32x32xf32>
    %29 = arith.addf %27, %28 : vector<32x32xf32>
    %30 = arith.truncf %29 : vector<32x32xf32> to vector<32x32xbf16>
    %c0_12 = arith.constant 0 : index
    %c0_13 = arith.constant 0 : index
    %c0_14 = arith.constant 0 : index
    %31 = vector.load %arg6[%c0_12, %c0_13, %c0_14] : memref<1x32x96xbf16, #tpu.memory_space<vmem>>, vector<1x32x96xbf16>
    %32 = vector.shape_cast %31 : vector<1x32x96xbf16> to vector<32x96xbf16>
    %cst_15 = arith.constant dense<0.000000e+00> : vector<32x96xf32>
    %33 = tpu.matmul %30, %32, %cst_15 {dimension_numbers = #tpu.dot_dimension_numbers<[1], [0], [0], [1], [0, 0, 1, 1], [], []>} : vector<32x32xbf16>, vector<32x96xbf16>, vector<32x96xf32> -> vector<32x96xf32>
    %c0_16 = arith.constant 0 : index
    %c0_17 = arith.constant 0 : index
    %c0_18 = arith.constant 0 : index
    %34 = vector.load %arg7[%c0_16, %c0_17, %c0_18] : memref<1x1x96xf32, #tpu.memory_space<vmem>>, vector<1x1x96xf32>
    %35 = vector.shape_cast %34 : vector<1x1x96xf32> to vector<1x96xf32>
    %36 = vector.broadcast %35 : vector<1x96xf32> to vector<32x96xf32>
    %37 = arith.addf %33, %36 : vector<32x96xf32>
    %38 = arith.truncf %37 : vector<32x96xf32> to vector<32x96xbf16>
    %39 = vector.extract_strided_slice %38 {offsets = [0, 0], sizes = [32, 8], strides = [1, 1]} : vector<32x96xbf16> to vector<32x8xbf16>
    %40 = vector.shape_cast %39 : vector<32x8xbf16> to vector<2x16x8xbf16>
    %41 = vector.extract_strided_slice %38 {offsets = [0, 8], sizes = [32, 8], strides = [1, 1]} : vector<32x96xbf16> to vector<32x8xbf16>
    %42 = vector.shape_cast %41 : vector<32x8xbf16> to vector<2x16x8xbf16>
    %43 = vector.extract_strided_slice %38 {offsets = [0, 16], sizes = [32, 8], strides = [1, 1]} : vector<32x96xbf16> to vector<32x8xbf16>
    %44 = vector.shape_cast %43 : vector<32x8xbf16> to vector<2x16x8xbf16>
    %45 = vector.extract_strided_slice %38 {offsets = [0, 24], sizes = [32, 8], strides = [1, 1]} : vector<32x96xbf16> to vector<32x8xbf16>
    %46 = vector.shape_cast %45 : vector<32x8xbf16> to vector<2x16x8xbf16>
    %47 = vector.shape_cast %40 : vector<2x16x8xbf16> to vector<1x2x16x8xbf16>
    %48 = vector.shape_cast %42 : vector<2x16x8xbf16> to vector<1x2x16x8xbf16>
    %49 = vector.shape_cast %44 : vector<2x16x8xbf16> to vector<1x2x16x8xbf16>
    %50 = vector.shape_cast %46 : vector<2x16x8xbf16> to vector<1x2x16x8xbf16>
    %51 = tpu.concatenate %47, %48, %49, %50 in 0 : vector<1x2x16x8xbf16>, vector<1x2x16x8xbf16>, vector<1x2x16x8xbf16>, vector<1x2x16x8xbf16> -> vector<4x2x16x8xbf16>
    %52 = vector.shape_cast %51 : vector<4x2x16x8xbf16> to vector<8x16x8xbf16>
    %53 = vector.extract_strided_slice %38 {offsets = [0, 32], sizes = [32, 8], strides = [1, 1]} : vector<32x96xbf16> to vector<32x8xbf16>
    %54 = vector.shape_cast %53 : vector<32x8xbf16> to vector<2x16x8xbf16>
    %55 = vector.extract_strided_slice %38 {offsets = [0, 40], sizes = [32, 8], strides = [1, 1]} : vector<32x96xbf16> to vector<32x8xbf16>
    %56 = vector.shape_cast %55 : vector<32x8xbf16> to vector<2x16x8xbf16>
    %57 = vector.extract_strided_slice %38 {offsets = [0, 48], sizes = [32, 8], strides = [1, 1]} : vector<32x96xbf16> to vector<32x8xbf16>
    %58 = vector.shape_cast %57 : vector<32x8xbf16> to vector<2x16x8xbf16>
    %59 = vector.extract_strided_slice %38 {offsets = [0, 56], sizes = [32, 8], strides = [1, 1]} : vector<32x96xbf16> to vector<32x8xbf16>
    %60 = vector.shape_cast %59 : vector<32x8xbf16> to vector<2x16x8xbf16>
    %61 = vector.shape_cast %54 : vector<2x16x8xbf16> to vector<1x2x16x8xbf16>
    %62 = vector.shape_cast %56 : vector<2x16x8xbf16> to vector<1x2x16x8xbf16>
    %63 = vector.shape_cast %58 : vector<2x16x8xbf16> to vector<1x2x16x8xbf16>
    %64 = vector.shape_cast %60 : vector<2x16x8xbf16> to vector<1x2x16x8xbf16>
    %65 = tpu.concatenate %61, %62, %63, %64 in 0 : vector<1x2x16x8xbf16>, vector<1x2x16x8xbf16>, vector<1x2x16x8xbf16>, vector<1x2x16x8xbf16> -> vector<4x2x16x8xbf16>
    %66 = vector.shape_cast %65 : vector<4x2x16x8xbf16> to vector<8x16x8xbf16>
    %67 = vector.extract_strided_slice %38 {offsets = [0, 64], sizes = [32, 8], strides = [1, 1]} : vector<32x96xbf16> to vector<32x8xbf16>
    %68 = vector.shape_cast %67 : vector<32x8xbf16> to vector<2x16x8xbf16>
    %69 = vector.extract_strided_slice %38 {offsets = [0, 72], sizes = [32, 8], strides = [1, 1]} : vector<32x96xbf16> to vector<32x8xbf16>
    %70 = vector.shape_cast %69 : vector<32x8xbf16> to vector<2x16x8xbf16>
    %71 = vector.extract_strided_slice %38 {offsets = [0, 80], sizes = [32, 8], strides = [1, 1]} : vector<32x96xbf16> to vector<32x8xbf16>
    %72 = vector.shape_cast %71 : vector<32x8xbf16> to vector<2x16x8xbf16>
    %73 = vector.extract_strided_slice %38 {offsets = [0, 88], sizes = [32, 8], strides = [1, 1]} : vector<32x96xbf16> to vector<32x8xbf16>
    %74 = vector.shape_cast %73 : vector<32x8xbf16> to vector<2x16x8xbf16>
    %75 = vector.shape_cast %68 : vector<2x16x8xbf16> to vector<1x2x16x8xbf16>
    %76 = vector.shape_cast %70 : vector<2x16x8xbf16> to vector<1x2x16x8xbf16>
    %77 = vector.shape_cast %72 : vector<2x16x8xbf16> to vector<1x2x16x8xbf16>
    %78 = vector.shape_cast %74 : vector<2x16x8xbf16> to vector<1x2x16x8xbf16>
    %79 = tpu.concatenate %75, %76, %77, %78 in 0 : vector<1x2x16x8xbf16>, vector<1x2x16x8xbf16>, vector<1x2x16x8xbf16>, vector<1x2x16x8xbf16> -> vector<4x2x16x8xbf16>
    %80 = vector.shape_cast %79 : vector<4x2x16x8xbf16> to vector<8x16x8xbf16>
    "tpu.trace_start"() <{level = 10 : i32, message = "bqd,bkd->bqk"}> : () -> ()
    %cst_19 = arith.constant dense<0.000000e+00> : vector<8x16x16xf32>
    %81 = tpu.matmul %52, %66, %cst_19 {dimension_numbers = #tpu.dot_dimension_numbers<[2], [2], [1], [1], [0, 0, 0, 1, 1, 1], [0], [0]>} : vector<8x16x8xbf16>, vector<8x16x8xbf16>, vector<8x16x16xf32> -> vector<8x16x16xf32>
    "tpu.trace_stop"() : () -> ()
    %c0_20 = arith.constant 0 : index
    %c0_21 = arith.constant 0 : index
    %82 = vector.load %arg3[%c0_20, %c0_21] : memref<16x16xf32, #tpu.memory_space<vmem>>, vector<16x16xf32>
    %83 = vector.shape_cast %82 : vector<16x16xf32> to vector<1x16x16xf32>
    %84 = vector.broadcast %83 : vector<1x16x16xf32> to vector<8x16x16xf32>
    %85 = arith.addf %81, %84 : vector<8x16x16xf32>
    %cst_22 = arith.constant dense<0xFF800000> : vector<8x16xf32>
    %86 = vector.multi_reduction <maximumf>, %85, %cst_22 [2] : vector<8x16x16xf32> to vector<8x16xf32>
    %87 = vector.shape_cast %86 : vector<8x16xf32> to vector<8x16x1xf32>
    %88 = vector.broadcast %87 : vector<8x16x1xf32> to vector<8x16x16xf32>
    %89 = arith.subf %85, %88 : vector<8x16x16xf32>
    %90 = math.exp %89 : vector<8x16x16xf32>
    %cst_23 = arith.constant dense<0.000000e+00> : vector<8x16xf32>
    %91 = vector.multi_reduction <add>, %90, %cst_23 [2] : vector<8x16x16xf32> to vector<8x16xf32>
    %92 = vector.shape_cast %91 : vector<8x16xf32> to vector<8x16x1xf32>
    %93 = tpu.reciprocal %92 {approx = true} : vector<8x16x1xf32> -> vector<8x16x1xf32>
    %94 = vector.broadcast %93 : vector<8x16x1xf32> to vector<8x16x16xf32>
    %95 = arith.mulf %90, %94 : vector<8x16x16xf32>
    %96 = arith.truncf %95 : vector<8x16x16xf32> to vector<8x16x16xbf16>
    "tpu.trace_start"() <{level = 10 : i32, message = "bqk,bkd->bqd"}> : () -> ()
    %cst_24 = arith.constant dense<0.000000e+00> : vector<8x16x8xf32>
    %97 = tpu.matmul %96, %80, %cst_24 {dimension_numbers = #tpu.dot_dimension_numbers<[2], [1], [1], [2], [0, 0, 0, 1, 1, 2], [0], [0]>} : vector<8x16x16xbf16>, vector<8x16x8xbf16>, vector<8x16x8xf32> -> vector<8x16x8xf32>
    "tpu.trace_stop"() : () -> ()
    %98 = arith.truncf %97 : vector<8x16x8xf32> to vector<8x16x8xbf16>
    %99 = vector.shape_cast %98 : vector<8x16x8xbf16> to vector<4x32x8xbf16>
    %100 = vector.extract_strided_slice %99 {offsets = [0, 0, 0], sizes = [1, 32, 8], strides = [1, 1, 1]} : vector<4x32x8xbf16> to vector<1x32x8xbf16>
    %101 = vector.shape_cast %100 : vector<1x32x8xbf16> to vector<32x8xbf16>
    %102 = vector.extract_strided_slice %99 {offsets = [1, 0, 0], sizes = [1, 32, 8], strides = [1, 1, 1]} : vector<4x32x8xbf16> to vector<1x32x8xbf16>
    %103 = vector.shape_cast %102 : vector<1x32x8xbf16> to vector<32x8xbf16>
    %104 = vector.extract_strided_slice %99 {offsets = [2, 0, 0], sizes = [1, 32, 8], strides = [1, 1, 1]} : vector<4x32x8xbf16> to vector<1x32x8xbf16>
    %105 = vector.shape_cast %104 : vector<1x32x8xbf16> to vector<32x8xbf16>
    %106 = vector.extract_strided_slice %99 {offsets = [3, 0, 0], sizes = [1, 32, 8], strides = [1, 1, 1]} : vector<4x32x8xbf16> to vector<1x32x8xbf16>
    %107 = vector.shape_cast %106 : vector<1x32x8xbf16> to vector<32x8xbf16>
    %108 = tpu.concatenate %101, %103, %105, %107 in 1 : vector<32x8xbf16>, vector<32x8xbf16>, vector<32x8xbf16>, vector<32x8xbf16> -> vector<32x32xbf16>
    %c0_25 = arith.constant 0 : index
    %c0_26 = arith.constant 0 : index
    %c0_27 = arith.constant 0 : index
    %109 = vector.load %arg8[%c0_25, %c0_26, %c0_27] : memref<1x32x32xbf16, #tpu.memory_space<vmem>>, vector<1x32x32xbf16>
    %110 = vector.shape_cast %109 : vector<1x32x32xbf16> to vector<32x32xbf16>
    %cst_28 = arith.constant dense<0.000000e+00> : vector<32x32xf32>
    %111 = tpu.matmul %108, %110, %cst_28 {dimension_numbers = #tpu.dot_dimension_numbers<[1], [0], [0], [1], [0, 0, 1, 1], [], []>} : vector<32x32xbf16>, vector<32x32xbf16>, vector<32x32xf32> -> vector<32x32xf32>
    %c0_29 = arith.constant 0 : index
    %c0_30 = arith.constant 0 : index
    %c0_31 = arith.constant 0 : index
    %112 = vector.load %arg9[%c0_29, %c0_30, %c0_31] : memref<1x1x32xf32, #tpu.memory_space<vmem>>, vector<1x1x32xf32>
    %113 = vector.shape_cast %112 : vector<1x1x32xf32> to vector<1x32xf32>
    %114 = vector.broadcast %113 : vector<1x32xf32> to vector<32x32xf32>
    %115 = arith.addf %111, %114 : vector<32x32xf32>
    %116 = arith.addf %3, %115 : vector<32x32xf32>
    %c0_32 = arith.constant 0 : index
    %c0_33 = arith.constant 0 : index
    %117 = vector.load %arg17[%c0_32, %c0_33] : memref<32x32xf32, #tpu.memory_space<vmem>>, vector<32x32xf32>
    tpu.vector_store %arg17[%c0_32, %c0_33], %116 {strides = array<i32>} : memref<32x32xf32, #tpu.memory_space<vmem>>, vector<32x32xf32>,
    %c0_34 = arith.constant 0 : index
    %c0_35 = arith.constant 0 : index
    %118 = vector.load %arg17[%c0_34, %c0_35] : memref<32x32xf32, #tpu.memory_space<vmem>>, vector<32x32xf32>
    %c0_36 = arith.constant 0 : index
    %c0_37 = arith.constant 0 : index
    %c0_38 = arith.constant 0 : index
    %119 = vector.load %arg10[%c0_36, %c0_37, %c0_38] : memref<1x1x32xf32, #tpu.memory_space<vmem>>, vector<1x1x32xf32>
    %120 = vector.shape_cast %119 : vector<1x1x32xf32> to vector<1x32xf32>
    %c0_39 = arith.constant 0 : index
    %c0_40 = arith.constant 0 : index
    %c0_41 = arith.constant 0 : index
    %121 = vector.load %arg11[%c0_39, %c0_40, %c0_41] : memref<1x1x32xf32, #tpu.memory_space<vmem>>, vector<1x1x32xf32>
    %122 = vector.shape_cast %121 : vector<1x1x32xf32> to vector<1x32xf32>
    %cst_42 = arith.constant dense<0.000000e+00> : vector<32xf32>
    %123 = vector.multi_reduction <add>, %118, %cst_42 [1] : vector<32x32xf32> to vector<32xf32>
    %124 = vector.shape_cast %123 : vector<32xf32> to vector<32x1xf32>
    %cst_43 = arith.constant 3.200000e+01 : f32
    %125 = vector.broadcast %cst_43 : f32 to vector<32x1xf32>
    %126 = arith.divf %124, %125 : vector<32x1xf32>
    %127 = vector.broadcast %126 : vector<32x1xf32> to vector<32x32xf32>
    %128 = arith.subf %118, %127 : vector<32x32xf32>
    %129 = arith.mulf %128, %128 : vector<32x32xf32>
    %cst_44 = arith.constant dense<0.000000e+00> : vector<32xf32>
    %130 = vector.multi_reduction <add>, %129, %cst_44 [1] : vector<32x32xf32> to vector<32xf32>
    %131 = vector.shape_cast %130 : vector<32xf32> to vector<32x1xf32>
    %cst_45 = arith.constant 3.200000e+01 : f32
    %132 = vector.broadcast %cst_45 : f32 to vector<32x1xf32>
    %133 = arith.divf %131, %132 : vector<32x1xf32>
    %134 = vector.broadcast %126 : vector<32x1xf32> to vector<32x32xf32>
    %135 = arith.subf %118, %134 : vector<32x32xf32>
    %cst_46 = arith.constant 9.99999974E-6 : f32
    %136 = vector.broadcast %cst_46 : f32 to vector<32x1xf32>
    %137 = arith.addf %133, %136 : vector<32x1xf32>
    %138 = math.rsqrt %137 : vector<32x1xf32>
    %139 = vector.broadcast %138 : vector<32x1xf32> to vector<32x32xf32>
    %140 = arith.mulf %135, %139 : vector<32x32xf32>
    %141 = vector.broadcast %120 : vector<1x32xf32> to vector<32x32xf32>
    %142 = arith.mulf %140, %141 : vector<32x32xf32>
    %143 = vector.broadcast %122 : vector<1x32xf32> to vector<32x32xf32>
    %144 = arith.addf %142, %143 : vector<32x32xf32>
    %145 = arith.truncf %144 : vector<32x32xf32> to vector<32x32xbf16>
    %c0_47 = arith.constant 0 : index
    %c0_48 = arith.constant 0 : index
    %c0_49 = arith.constant 0 : index
    %146 = vector.load %arg12[%c0_47, %c0_48, %c0_49] : memref<1x32x128xbf16, #tpu.memory_space<vmem>>, vector<1x32x128xbf16>
    %147 = vector.shape_cast %146 : vector<1x32x128xbf16> to vector<32x128xbf16>
    %cst_50 = arith.constant dense<0.000000e+00> : vector<32x128xf32>
    %148 = tpu.matmul %145, %147, %cst_50 {dimension_numbers = #tpu.dot_dimension_numbers<[1], [0], [0], [1], [0, 0, 1, 1], [], []>} : vector<32x32xbf16>, vector<32x128xbf16>, vector<32x128xf32> -> vector<32x128xf32>
    %c0_51 = arith.constant 0 : index
    %c0_52 = arith.constant 0 : index
    %c0_53 = arith.constant 0 : index
    %149 = vector.load %arg13[%c0_51, %c0_52, %c0_53] : memref<1x1x128xf32, #tpu.memory_space<vmem>>, vector<1x1x128xf32>
    %150 = vector.shape_cast %149 : vector<1x1x128xf32> to vector<1x128xf32>
    %151 = vector.broadcast %150 : vector<1x128xf32> to vector<32x128xf32>
    %152 = arith.addf %148, %151 : vector<32x128xf32>
    %cst_54 = arith.constant 1.702000e+00 : f32
    %153 = vector.broadcast %cst_54 : f32 to vector<32x128xf32>
    %154 = arith.mulf %153, %152 : vector<32x128xf32>
    %155 = arith.negf %154 : vector<32x128xf32>
    %156 = math.exp %155 : vector<32x128xf32>
    %cst_55 = arith.constant 1.000000e+00 : f32
    %157 = vector.broadcast %cst_55 : f32 to vector<32x128xf32>
    %158 = arith.addf %157, %156 : vector<32x128xf32>
    %159 = arith.divf %157, %158 : vector<32x128xf32>
    %160 = arith.mulf %152, %159 : vector<32x128xf32>
    %161 = arith.truncf %160 : vector<32x128xf32> to vector<32x128xbf16>
    %c0_56 = arith.constant 0 : index
    %c0_57 = arith.constant 0 : index
    %c0_58 = arith.constant 0 : index
    %162 = vector.load %arg14[%c0_56, %c0_57, %c0_58] : memref<1x128x32xbf16, #tpu.memory_space<vmem>>, vector<1x128x32xbf16>
    %163 = vector.shape_cast %162 : vector<1x128x32xbf16> to vector<128x32xbf16>
    %cst_59 = arith.constant dense<0.000000e+00> : vector<32x32xf32>
    %164 = tpu.matmul %161, %163, %cst_59 {dimension_numbers = #tpu.dot_dimension_numbers<[1], [0], [0], [1], [0, 0, 1, 1], [], []>} : vector<32x128xbf16>, vector<128x32xbf16>, vector<32x32xf32> -> vector<32x32xf32>
    %c0_60 = arith.constant 0 : index
    %c0_61 = arith.constant 0 : index
    %c0_62 = arith.constant 0 : index
    %165 = vector.load %arg15[%c0_60, %c0_61, %c0_62] : memref<1x1x32xf32, #tpu.memory_space<vmem>>, vector<1x1x32xf32>
    %166 = vector.shape_cast %165 : vector<1x1x32xf32> to vector<1x32xf32>
    %167 = vector.broadcast %166 : vector<1x32xf32> to vector<32x32xf32>
    %168 = arith.addf %164, %167 : vector<32x32xf32>
    %169 = arith.addf %118, %168 : vector<32x32xf32>
    %c0_63 = arith.constant 0 : index
    %c0_64 = arith.constant 0 : index
    %170 = vector.load %arg17[%c0_63, %c0_64] : memref<32x32xf32, #tpu.memory_space<vmem>>, vector<32x32xf32>
    tpu.vector_store %arg17[%c0_63, %c0_64], %169 {strides = array<i32>} : memref<32x32xf32, #tpu.memory_space<vmem>>, vector<32x32xf32>,
    %c1_i32 = arith.constant 1 : i32
    %171 = arith.cmpi eq, %arg1, %c1_i32 : i32
    %172 = arith.extui %171 : i1 to i32
    %c0_i32_65 = arith.constant 0 : i32
    %173 = arith.cmpi ne, %172, %c0_i32_65 : i32
    scf.if %173 {
      %c0_66 = arith.constant 0 : index
      %c0_67 = arith.constant 0 : index
      %174 = vector.load %arg17[%c0_66, %c0_67] : memref<32x32xf32, #tpu.memory_space<vmem>>, vector<32x32xf32>
      %175 = vector.shape_cast %174 : vector<32x32xf32> to vector<2x16x32xf32>
      %c0_68 = arith.constant 0 : index
      %c0_69 = arith.constant 0 : index
      %c0_70 = arith.constant 0 : index
      %176 = vector.load %arg16[%c0_68, %c0_69, %c0_70] : memref<2x16x32xf32, #tpu.memory_space<vmem>>, vector<2x16x32xf32>
      tpu.vector_store %arg16[%c0_68, %c0_69, %c0_70], %175 {strides = array<i32>} : memref<2x16x32xf32, #tpu.memory_space<vmem>>, vector<2x16x32xf32>,
    } else {
    }
    return
  }
  func.func @transform_0(%arg0: i32, %arg1: i32) -> (i32, i32, i32) {
    %c0_i32 = arith.constant 0 : i32
    %c0_i32_0 = arith.constant 0 : i32
    %c0_i32_1 = arith.constant 0 : i32
    return %arg0, %c0_i32, %c0_i32_0 : i32, i32, i32
  }
  func.func @transform_1(%arg0: i32, %arg1: i32) -> (i32, i32) {
    %c0_i32 = arith.constant 0 : i32
    %c0_i32_0 = arith.constant 0 : i32
    %c0_i32_1 = arith.constant 0 : i32
    return %c0_i32, %c0_i32_0 : i32, i32
  }
  func.func @transform_2(%arg0: i32, %arg1: i32) -> (i32, i32, i32) {
    %c0_i32 = arith.constant 0 : i32
    %c0_i32_0 = arith.constant 0 : i32
    %c0_i32_1 = arith.constant 0 : i32
    return %arg1, %c0_i32, %c0_i32_0 : i32, i32, i32
  }
  func.func @transform_3(%arg0: i32, %arg1: i32) -> (i32, i32, i32) {
    %c0_i32 = arith.constant 0 : i32
    %c0_i32_0 = arith.constant 0 : i32
    %c0_i32_1 = arith.constant 0 : i32
    return %arg1, %c0_i32, %c0_i32_0 : i32, i32, i32
  }
  func.func @transform_4(%arg0: i32, %arg1: i32) -> (i32, i32, i32) {
    %c0_i32 = arith.constant 0 : i32
    %c0_i32_0 = arith.constant 0 : i32
    %c0_i32_1 = arith.constant 0 : i32
    return %arg1, %c0_i32, %c0_i32_0 : i32, i32, i32
  }
  func.func @transform_5(%arg0: i32, %arg1: i32) -> (i32, i32, i32) {
    %c0_i32 = arith.constant 0 : i32
    %c0_i32_0 = arith.constant 0 : i32
    %c0_i32_1 = arith.constant 0 : i32
    return %arg1, %c0_i32, %c0_i32_0 : i32, i32, i32
  }
  func.func @transform_6(%arg0: i32, %arg1: i32) -> (i32, i32, i32) {
    %c0_i32 = arith.constant 0 : i32
    %c0_i32_0 = arith.constant 0 : i32
    %c0_i32_1 = arith.constant 0 : i32
    return %arg1, %c0_i32, %c0_i32_0 : i32, i32, i32
  }
  func.func @transform_7(%arg0: i32, %arg1: i32) -> (i32, i32, i32) {
    %c0_i32 = arith.constant 0 : i32
    %c0_i32_0 = arith.constant 0 : i32
    %c0_i32_1 = arith.constant 0 : i32
    return %arg1, %c0_i32, %c0_i32_0 : i32, i32, i32
  }
  func.func @transform_8(%arg0: i32, %arg1: i32) -> (i32, i32, i32) {
    %c0_i32 = arith.constant 0 : i32
    %c0_i32_0 = arith.constant 0 : i32
    %c0_i32_1 = arith.constant 0 : i32
    return %arg1, %c0_i32, %c0_i32_0 : i32, i32, i32
  }
  func.func @transform_9(%arg0: i32, %arg1: i32) -> (i32, i32, i32) {
    %c0_i32 = arith.constant 0 : i32
    %c0_i32_0 = arith.constant 0 : i32
    %c0_i32_1 = arith.constant 0 : i32
    return %arg1, %c0_i32, %c0_i32_0 : i32, i32, i32
  }
  func.func @transform_10(%arg0: i32, %arg1: i32) -> (i32, i32, i32) {
    %c0_i32 = arith.constant 0 : i32
    %c0_i32_0 = arith.constant 0 : i32
    %c0_i32_1 = arith.constant 0 : i32
    return %arg1, %c0_i32, %c0_i32_0 : i32, i32, i32
  }
  func.func @transform_11(%arg0: i32, %arg1: i32) -> (i32, i32, i32) {
    %c0_i32 = arith.constant 0 : i32
    %c0_i32_0 = arith.constant 0 : i32
    %c0_i32_1 = arith.constant 0 : i32
    return %arg1, %c0_i32, %c0_i32_0 : i32, i32, i32
  }
  func.func @transform_12(%arg0: i32, %arg1: i32) -> (i32, i32, i32) {
    %c0_i32 = arith.constant 0 : i32
    %c0_i32_0 = arith.constant 0 : i32
    %c0_i32_1 = arith.constant 0 : i32
    return %arg1, %c0_i32, %c0_i32_0 : i32, i32, i32
  }
  func.func @transform_13(%arg0: i32, %arg1: i32) -> (i32, i32, i32) {
    %c0_i32 = arith.constant 0 : i32
    %c0_i32_0 = arith.constant 0 : i32
    %c0_i32_1 = arith.constant 0 : i32
    return %arg1, %c0_i32, %c0_i32_0 : i32, i32, i32
  }
  func.func @transform_14(%arg0: i32, %arg1: i32) -> (i32, i32, i32) {
    %c0_i32 = arith.constant 0 : i32
    %c0_i32_0 = arith.constant 0 : i32
    %c0_i32_1 = arith.constant 0 : i32
    return %arg0, %c0_i32, %c0_i32_0 : i32, i32, i32
  }
}

</mosaic_0001>

<llo_original>
// kernel: tpu_custom_call.1
$region0: #{tpu_custom_call.1}
  #allocation0 [shape = 'u32[]', space=smem, size = 0x4, offset = 0x4, fixed_abs, tag = 'smem constant byte address 0x4 - core index']
  #allocation1 [shape = 'u32[144,128]{1,0:T(1,128)}', space=vmem, size = 0x12000, scoped, tag = 'internal scratch']
  #allocation2 [shape = 'f32[32,32]{1,0:T(8,128)}', space=vmem, size = 0x4000, scoped, tag = 'scratch operand']
  %s0 = inlined_call_operand.vmem [shape: f32[2,16,32], index: 0, kind: input, shape index: {}]
  %s1 = inlined_call_operand.vmem [shape: f32[16,16], index: 1, kind: input, shape index: {}]
  %s2 = inlined_call_operand.vmem [shape: f32[2,1,32], index: 2, kind: input, shape index: {}]
  %s3 = inlined_call_operand.vmem [shape: f32[2,1,32], index: 3, kind: input, shape index: {}]
  %s4 = inlined_call_operand.vmem [shape: bf16[2,32,96], index: 4, kind: input, shape index: {}]
  %s5 = inlined_call_operand.vmem [shape: f32[2,1,96], index: 5, kind: input, shape index: {}]
  %s6 = inlined_call_operand.vmem [shape: bf16[2,32,32], index: 6, kind: input, shape index: {}]
  %s7 = inlined_call_operand.vmem [shape: f32[2,1,32], index: 7, kind: input, shape index: {}]
  %s8 = inlined_call_operand.vmem [shape: f32[2,1,32], index: 8, kind: input, shape index: {}]
  %s9 = inlined_call_operand.vmem [shape: f32[2,1,32], index: 9, kind: input, shape index: {}]
  %s10 = inlined_call_operand.vmem [shape: bf16[2,32,128], index: 10, kind: input, shape index: {}]
  %s11 = inlined_call_operand.vmem [shape: f32[2,1,128], index: 11, kind: input, shape index: {}]
  %s12 = inlined_call_operand.vmem [shape: bf16[2,128,32], index: 12, kind: input, shape index: {}]
  %s13 = inlined_call_operand.vmem [shape: f32[2,1,32], index: 13, kind: input, shape index: {}]
  %s14 = inlined_call_operand.hbm [shape: f32[2,16,32], index: 14, kind: output, shape index: {}]
  %s15 = sld [smem:[#allocation0]]
  $region97: #{tpu_custom_call.1} parent=0
    _
  %s17 = ssub.s32 1, %s15
  %s18 = scalar_select 0, %s17, %s15
  $region1: #{tpu_custom_call.1} parent=0
    #allocation3 [shape = 'u8[16384]{0}', space=vmem, size = 0x4000, scoped, tag = 'output window, operand 0, single buffered']
    #allocation4 [shape = 's32[2]{0}', space=sflag, size = 0x8, scoped, tag = 'scoped memory for tpu_custom_call.1']
    %19 = vsyncpa [#allocation4], 0
    loop: start=0, step=1, limit=4
    $region2: #{tpu_custom_call.1} parent=1 // loop_pre_header
      _
    $region3: #{tpu_custom_call.1} parent=1 // loop_header
      %s21 = sphi 0, %s25
      %p22 = scmp.ge.s32.totalorder %s21, 4
      %s28 = sphi 0, %s40
      %s29 = sphi 0, %s36
      %s30 = sphi 0, %s28
      %s31 = sphi 0, %s29
      %s32 = sphi 0, %s30
      %s33 = sphi 0, %s31
      %s43 = sphi 0, %s45
      %s46 = sphi 0, %s43
      %s47 = sphi 0, %s46
      %s63 = sphi 0, %s47
      %s67 = sphi 0, %s67
      %s69 = sphi 0, %s67
      %s70 = sphi 0, %s69
      %s84 = sphi 0, %s70
      %s90 = sphi 0, %s92
      %s93 = sphi 0, %s90
      %s94 = sphi 0, %s93
      %s110 = sphi 0, %s94
      %s116 = sphi 0, %s118
      %s119 = sphi 0, %s116
      %s120 = sphi 0, %s119
      %s136 = sphi 0, %s120
      %s142 = sphi 0, %s144
      %s145 = sphi 0, %s142
      %s146 = sphi 0, %s145
      %s162 = sphi 0, %s146
      %s168 = sphi 0, %s170
      %s171 = sphi 0, %s168
      %s172 = sphi 0, %s171
      %s188 = sphi 0, %s172
      %s194 = sphi 0, %s196
      %s197 = sphi 0, %s194
      %s198 = sphi 0, %s197
      %s214 = sphi 0, %s198
      %s220 = sphi 0, %s222
      %s223 = sphi 0, %s220
      %s224 = sphi 0, %s223
      %s240 = sphi 0, %s224
      %s246 = sphi 0, %s248
      %s249 = sphi 0, %s246
      %s250 = sphi 0, %s249
      %s266 = sphi 0, %s250
      %s272 = sphi 0, %s274
      %s275 = sphi 0, %s272
      %s276 = sphi 0, %s275
      %s292 = sphi 0, %s276
      %s298 = sphi 0, %s300
      %s301 = sphi 0, %s298
      %s302 = sphi 0, %s301
      %s318 = sphi 0, %s302
      %s324 = sphi 0, %s326
      %s327 = sphi 0, %s324
      %s328 = sphi 0, %s327
      %s344 = sphi 0, %s328
      %s350 = sphi 0, %s352
      %s353 = sphi 0, %s350
      %s354 = sphi 0, %s353
      %s370 = sphi 0, %s354
      %s376 = sphi 0, %s378
      %s379 = sphi 0, %s376
      %s380 = sphi 0, %s379
      %s396 = sphi 0, %s380
      %s402 = sphi 0, %s404
      %s405 = sphi 0, %s402
      %s406 = sphi 0, %s405
      %s422 = sphi 0, %s406
    $region4: #{tpu_custom_call.1} parent=1 // loop_header_branch
      %24 = sbr.rel (%p22) target = $region8
    $region5: #{tpu_custom_call.1} parent=1 // loop_body
      %s26 = ssub.s32 %s21, 1
      %s27 = ssub.s32 %s21, 2
      %s34 = sadd.s32 1, %s29
      %p35 = scmp.ge.s32.totalorder %s34, 2
      %s36 = scalar_select %p35, 0, %s34
      %s37 = sadd.s32 1, %s28
      %s38 = scalar_select %p35, %s37, %s28
      %p39 = scmp.ge.s32.totalorder %s38, 1
      %s40 = scalar_select %p39, 0, %s38
      %s41 = ssub.s32 %s28, %s40
      %p42 = scmp.eq.s32.totalorder %s41, 0
      %s44 = sadd.s32 %s43, 1
      %s45 = scalar_select %p42, %s43, %s44
      %p48 = pneg %p42
      %p49 = scmp.eq.s32.totalorder %s21, 1
      %p50 = por %p48, %p49
      %p51 = scmp.ne.s32.totalorder %s43, %s46
      %p52 = scmp.eq.s32.totalorder %s21, 0
      %p53 = por %p51, %p52
      %p54 = scmp.ne.s32.totalorder %s43, %s46
      %p55 = scmp.eq.s32.totalorder %s26, 1
      %p56 = por %p54, %p55
      %p57 = scmp.ne.s32.totalorder %s46, %s47
      %p58 = scmp.eq.s32.totalorder %s26, 0
      %p59 = por %p57, %p58
      %p60 = scmp.ne.s32.totalorder %s46, %s47
      %p61 = scmp.eq.s32.totalorder %s27, 1
      %p62 = por %p60, %p61
      %p64 = scmp.ne.s32.totalorder %s47, %s63
      %p65 = scmp.eq.s32.totalorder %s27, 0
      %p66 = por %p64, %p65
      %s68 = sadd.s32 %s67, 1
      %p71 = scmp.eq.s32.totalorder %s21, 1
      %p72 = scmp.ne.s32.totalorder %s67, %s69
      %p73 = scmp.eq.s32.totalorder %s21, 0
      %p74 = por %p72, %p73
      %p75 = scmp.ne.s32.totalorder %s67, %s69
      %p76 = scmp.eq.s32.totalorder %s26, 1
      %p77 = por %p75, %p76
      %p78 = scmp.ne.s32.totalorder %s69, %s70
      %p79 = scmp.eq.s32.totalorder %s26, 0
      %p80 = por %p78, %p79
      %p81 = scmp.ne.s32.totalorder %s69, %s70
      %p82 = scmp.eq.s32.totalorder %s27, 1
      %p83 = por %p81, %p82
      %p85 = scmp.ne.s32.totalorder %s70, %s84
      %p86 = scmp.eq.s32.totalorder %s27, 0
      %p87 = por %p85, %p86
      %s88 = ssub.s32 %s29, %s36
      %p89 = scmp.eq.s32.totalorder %s88, 0
      %s91 = sadd.s32 %s90, 1
      %s92 = scalar_select %p89, %s90, %s91
      %p95 = pneg %p89
      %p96 = scmp.eq.s32.totalorder %s21, 1
      %p97 = por %p95, %p96
      %p98 = scmp.ne.s32.totalorder %s90, %s93
      %p99 = scmp.eq.s32.totalorder %s21, 0
      %p100 = por %p98, %p99
      %p101 = scmp.ne.s32.totalorder %s90, %s93
      %p102 = scmp.eq.s32.totalorder %s26, 1
      %p103 = por %p101, %p102
      %p104 = scmp.ne.s32.totalorder %s93, %s94
      %p105 = scmp.eq.s32.totalorder %s26, 0
      %p106 = por %p104, %p105
      %p107 = scmp.ne.s32.totalorder %s93, %s94
      %p108 = scmp.eq.s32.totalorder %s27, 1
      %p109 = por %p107, %p108
      %p111 = scmp.ne.s32.totalorder %s94, %s110
      %p112 = scmp.eq.s32.totalorder %s27, 0
      %p113 = por %p111, %p112
      %s114 = ssub.s32 %s29, %s36
      %p115 = scmp.eq.s32.totalorder %s114, 0
      %s117 = sadd.s32 %s116, 1
      %s118 = scalar_select %p115, %s116, %s117
      %p121 = pneg %p115
      %p122 = scmp.eq.s32.totalorder %s21, 1
      %p123 = por %p121, %p122
      %p124 = scmp.ne.s32.totalorder %s116, %s119
      %p125 = scmp.eq.s32.totalorder %s21, 0
      %p126 = por %p124, %p125
      %p127 = scmp.ne.s32.totalorder %s116, %s119
      %p128 = scmp.eq.s32.totalorder %s26, 1
      %p129 = por %p127, %p128
      %p130 = scmp.ne.s32.totalorder %s119, %s120
      %p131 = scmp.eq.s32.totalorder %s26, 0
      %p132 = por %p130, %p131
      %p133 = scmp.ne.s32.totalorder %s119, %s120
      %p134 = scmp.eq.s32.totalorder %s27, 1
      %p135 = por %p133, %p134
      %p137 = scmp.ne.s32.totalorder %s120, %s136
      %p138 = scmp.eq.s32.totalorder %s27, 0
      %p139 = por %p137, %p138
      %s140 = ssub.s32 %s29, %s36
      %p141 = scmp.eq.s32.totalorder %s140, 0
      %s143 = sadd.s32 %s142, 1
      %s144 = scalar_select %p141, %s142, %s143
      %p147 = pneg %p141
      %p148 = scmp.eq.s32.totalorder %s21, 1
      %p149 = por %p147, %p148
      %p150 = scmp.ne.s32.totalorder %s142, %s145
      %p151 = scmp.eq.s32.totalorder %s21, 0
      %p152 = por %p150, %p151
      %p153 = scmp.ne.s32.totalorder %s142, %s145
      %p154 = scmp.eq.s32.totalorder %s26, 1
      %p155 = por %p153, %p154
      %p156 = scmp.ne.s32.totalorder %s145, %s146
      %p157 = scmp.eq.s32.totalorder %s26, 0
      %p158 = por %p156, %p157
      %p159 = scmp.ne.s32.totalorder %s145, %s146
      %p160 = scmp.eq.s32.totalorder %s27, 1
      %p161 = por %p159, %p160
      %p163 = scmp.ne.s32.totalorder %s146, %s162
      %p164 = scmp.eq.s32.totalorder %s27, 0
      %p165 = por %p163, %p164
      %s166 = ssub.s32 %s29, %s36
      %p167 = scmp.eq.s32.totalorder %s166, 0
      %s169 = sadd.s32 %s168, 1
      %s170 = scalar_select %p167, %s168, %s169
      %p173 = pneg %p167
      %p174 = scmp.eq.s32.totalorder %s21, 1
      %p175 = por %p173, %p174
      %p176 = scmp.ne.s32.totalorder %s168, %s171
      %p177 = scmp.eq.s32.totalorder %s21, 0
      %p178 = por %p176, %p177
      %p179 = scmp.ne.s32.totalorder %s168, %s171
      %p180 = scmp.eq.s32.totalorder %s26, 1
      %p181 = por %p179, %p180
      %p182 = scmp.ne.s32.totalorder %s171, %s172
      %p183 = scmp.eq.s32.totalorder %s26, 0
      %p184 = por %p182, %p183
      %p185 = scmp.ne.s32.totalorder %s171, %s172
      %p186 = scmp.eq.s32.totalorder %s27, 1
      %p187 = por %p185, %p186
      %p189 = scmp.ne.s32.totalorder %s172, %s188
      %p190 = scmp.eq.s32.totalorder %s27, 0
      %p191 = por %p189, %p190
      %s192 = ssub.s32 %s29, %s36
      %p193 = scmp.eq.s32.totalorder %s192, 0
      %s195 = sadd.s32 %s194, 1
      %s196 = scalar_select %p193, %s194, %s195
      %p199 = pneg %p193
      %p200 = scmp.eq.s32.totalorder %s21, 1
      %p201 = por %p199, %p200
      %p202 = scmp.ne.s32.totalorder %s194, %s197
      %p203 = scmp.eq.s32.totalorder %s21, 0
      %p204 = por %p202, %p203
      %p205 = scmp.ne.s32.totalorder %s194, %s197
      %p206 = scmp.eq.s32.totalorder %s26, 1
      %p207 = por %p205, %p206
      %p208 = scmp.ne.s32.totalorder %s197, %s198
      %p209 = scmp.eq.s32.totalorder %s26, 0
      %p210 = por %p208, %p209
      %p211 = scmp.ne.s32.totalorder %s197, %s198
      %p212 = scmp.eq.s32.totalorder %s27, 1
      %p213 = por %p211, %p212
      %p215 = scmp.ne.s32.totalorder %s198, %s214
      %p216 = scmp.eq.s32.totalorder %s27, 0
      %p217 = por %p215, %p216
      %s218 = ssub.s32 %s29, %s36
      %p219 = scmp.eq.s32.totalorder %s218, 0
      %s221 = sadd.s32 %s220, 1
      %s222 = scalar_select %p219, %s220, %s221
      %p225 = pneg %p219
      %p226 = scmp.eq.s32.totalorder %s21, 1
      %p227 = por %p225, %p226
      %p228 = scmp.ne.s32.totalorder %s220, %s223
      %p229 = scmp.eq.s32.totalorder %s21, 0
      %p230 = por %p228, %p229
      %p231 = scmp.ne.s32.totalorder %s220, %s223
      %p232 = scmp.eq.s32.totalorder %s26, 1
      %p233 = por %p231, %p232
      %p234 = scmp.ne.s32.totalorder %s223, %s224
      %p235 = scmp.eq.s32.totalorder %s26, 0
      %p236 = por %p234, %p235
      %p237 = scmp.ne.s32.totalorder %s223, %s224
      %p238 = scmp.eq.s32.totalorder %s27, 1
      %p239 = por %p237, %p238
      %p241 = scmp.ne.s32.totalorder %s224, %s240
      %p242 = scmp.eq.s32.totalorder %s27, 0
      %p243 = por %p241, %p242
      %s244 = ssub.s32 %s29, %s36
      %p245 = scmp.eq.s32.totalorder %s244, 0
      %s247 = sadd.s32 %s246, 1
      %s248 = scalar_select %p245, %s246, %s247
      %p251 = pneg %p245
      %p252 = scmp.eq.s32.totalorder %s21, 1
      %p253 = por %p251, %p252
      %p254 = scmp.ne.s32.totalorder %s246, %s249
      %p255 = scmp.eq.s32.totalorder %s21, 0
      %p256 = por %p254, %p255
      %p257 = scmp.ne.s32.totalorder %s246, %s249
      %p258 = scmp.eq.s32.totalorder %s26, 1
      %p259 = por %p257, %p258
      %p260 = scmp.ne.s32.totalorder %s249, %s250
      %p261 = scmp.eq.s32.totalorder %s26, 0
      %p262 = por %p260, %p261
      %p263 = scmp.ne.s32.totalorder %s249, %s250
      %p264 = scmp.eq.s32.totalorder %s27, 1
      %p265 = por %p263, %p264
      %p267 = scmp.ne.s32.totalorder %s250, %s266
      %p268 = scmp.eq.s32.totalorder %s27, 0
      %p269 = por %p267, %p268
      %s270 = ssub.s32 %s29, %s36
      %p271 = scmp.eq.s32.totalorder %s270, 0
      %s273 = sadd.s32 %s272, 1
      %s274 = scalar_select %p271, %s272, %s273
      %p277 = pneg %p271
      %p278 = scmp.eq.s32.totalorder %s21, 1
      %p279 = por %p277, %p278
      %p280 = scmp.ne.s32.totalorder %s272, %s275
      %p281 = scmp.eq.s32.totalorder %s21, 0
      %p282 = por %p280, %p281
      %p283 = scmp.ne.s32.totalorder %s272, %s275
      %p284 = scmp.eq.s32.totalorder %s26, 1
      %p285 = por %p283, %p284
      %p286 = scmp.ne.s32.totalorder %s275, %s276
      %p287 = scmp.eq.s32.totalorder %s26, 0
      %p288 = por %p286, %p287
      %p289 = scmp.ne.s32.totalorder %s275, %s276
      %p290 = scmp.eq.s32.totalorder %s27, 1
      %p291 = por %p289, %p290
      %p293 = scmp.ne.s32.totalorder %s276, %s292
      %p294 = scmp.eq.s32.totalorder %s27, 0
      %p295 = por %p293, %p294
      %s296 = ssub.s32 %s29, %s36
      %p297 = scmp.eq.s32.totalorder %s296, 0
      %s299 = sadd.s32 %s298, 1
      %s300 = scalar_select %p297, %s298, %s299
      %p303 = pneg %p297
      %p304 = scmp.eq.s32.totalorder %s21, 1
      %p305 = por %p303, %p304
      %p306 = scmp.ne.s32.totalorder %s298, %s301
      %p307 = scmp.eq.s32.totalorder %s21, 0
      %p308 = por %p306, %p307
      %p309 = scmp.ne.s32.totalorder %s298, %s301
      %p310 = scmp.eq.s32.totalorder %s26, 1
      %p311 = por %p309, %p310
      %p312 = scmp.ne.s32.totalorder %s301, %s302
      %p313 = scmp.eq.s32.totalorder %s26, 0
      %p314 = por %p312, %p313
      %p315 = scmp.ne.s32.totalorder %s301, %s302
      %p316 = scmp.eq.s32.totalorder %s27, 1
      %p317 = por %p315, %p316
      %p319 = scmp.ne.s32.totalorder %s302, %s318
      %p320 = scmp.eq.s32.totalorder %s27, 0
      %p321 = por %p319, %p320
      %s322 = ssub.s32 %s29, %s36
      %p323 = scmp.eq.s32.totalorder %s322, 0
      %s325 = sadd.s32 %s324, 1
      %s326 = scalar_select %p323, %s324, %s325
      %p329 = pneg %p323
      %p330 = scmp.eq.s32.totalorder %s21, 1
      %p331 = por %p329, %p330
      %p332 = scmp.ne.s32.totalorder %s324, %s327
      %p333 = scmp.eq.s32.totalorder %s21, 0
      %p334 = por %p332, %p333
      %p335 = scmp.ne.s32.totalorder %s324, %s327
      %p336 = scmp.eq.s32.totalorder %s26, 1
      %p337 = por %p335, %p336
      %p338 = scmp.ne.s32.totalorder %s327, %s328
      %p339 = scmp.eq.s32.totalorder %s26, 0
      %p340 = por %p338, %p339
      %p341 = scmp.ne.s32.totalorder %s327, %s328
      %p342 = scmp.eq.s32.totalorder %s27, 1
      %p343 = por %p341, %p342
      %p345 = scmp.ne.s32.totalorder %s328, %s344
      %p346 = scmp.eq.s32.totalorder %s27, 0
      %p347 = por %p345, %p346
      %s348 = ssub.s32 %s29, %s36
      %p349 = scmp.eq.s32.totalorder %s348, 0
      %s351 = sadd.s32 %s350, 1
      %s352 = scalar_select %p349, %s350, %s351
      %p355 = pneg %p349
      %p356 = scmp.eq.s32.totalorder %s21, 1
      %p357 = por %p355, %p356
      %p358 = scmp.ne.s32.totalorder %s350, %s353
      %p359 = scmp.eq.s32.totalorder %s21, 0
      %p360 = por %p358, %p359
      %p361 = scmp.ne.s32.totalorder %s350, %s353
      %p362 = scmp.eq.s32.totalorder %s26, 1
      %p363 = por %p361, %p362
      %p364 = scmp.ne.s32.totalorder %s353, %s354
      %p365 = scmp.eq.s32.totalorder %s26, 0
      %p366 = por %p364, %p365
      %p367 = scmp.ne.s32.totalorder %s353, %s354
      %p368 = scmp.eq.s32.totalorder %s27, 1
      %p369 = por %p367, %p368
      %p371 = scmp.ne.s32.totalorder %s354, %s370
      %p372 = scmp.eq.s32.totalorder %s27, 0
      %p373 = por %p371, %p372
      %s374 = ssub.s32 %s29, %s36
      %p375 = scmp.eq.s32.totalorder %s374, 0
      %s377 = sadd.s32 %s376, 1
      %s378 = scalar_select %p375, %s376, %s377
      %p381 = pneg %p375
      %p382 = scmp.eq.s32.totalorder %s21, 1
      %p383 = por %p381, %p382
      %p384 = scmp.ne.s32.totalorder %s376, %s379
      %p385 = scmp.eq.s32.totalorder %s21, 0
      %p386 = por %p384, %p385
      %p387 = scmp.ne.s32.totalorder %s376, %s379
      %p388 = scmp.eq.s32.totalorder %s26, 1
      %p389 = por %p387, %p388
      %p390 = scmp.ne.s32.totalorder %s379, %s380
      %p391 = scmp.eq.s32.totalorder %s26, 0
      %p392 = por %p390, %p391
      %p393 = scmp.ne.s32.totalorder %s379, %s380
      %p394 = scmp.eq.s32.totalorder %s27, 1
      %p395 = por %p393, %p394
      %p397 = scmp.ne.s32.totalorder %s380, %s396
      %p398 = scmp.eq.s32.totalorder %s27, 0
      %p399 = por %p397, %p398
      %s400 = ssub.s32 %s28, %s40
      %p401 = scmp.eq.s32.totalorder %s400, 0
      %s403 = sadd.s32 %s402, 1
      %s404 = scalar_select %p401, %s402, %s403
      %p407 = pneg %p401
      %p408 = scmp.eq.s32.totalorder %s21, 1
      %p409 = por %p407, %p408
      %p410 = scmp.ne.s32.totalorder %s402, %s405
      %p411 = scmp.eq.s32.totalorder %s21, 0
      %p412 = por %p410, %p411
      %p413 = scmp.ne.s32.totalorder %s402, %s405
      %p414 = scmp.eq.s32.totalorder %s26, 1
      %p415 = por %p413, %p414
      %p416 = scmp.ne.s32.totalorder %s405, %s406
      %p417 = scmp.eq.s32.totalorder %s26, 0
      %p418 = por %p416, %p417
      %p419 = scmp.ne.s32.totalorder %s405, %s406
      %p420 = scmp.eq.s32.totalorder %s27, 1
      %p421 = por %p419, %p420
      %p423 = scmp.ne.s32.totalorder %s406, %s422
      %p424 = scmp.eq.s32.totalorder %s27, 0
      %p425 = por %p423, %p424
      %p426 = scmp.le.s32.totalorder 1, %s21
      %p427 = scmp.lt.s32.totalorder %s21, 3
      %p428 = pnand %p426, %p427
      %p429 = pneg %p428
      // Predicated region
      $region9: #{tpu_custom_call.1} parent=5 // pred_check
        _
      $region10: #{tpu_custom_call.1} parent=5 // pred_check_branch
        %431 = sbr.rel (%p428) target = $region12
      $region11: #{tpu_custom_call.1} parent=5 // pred_region
        %s432 = ssub.s32 %s21, 1
        // Predicated region
        $region13: #{tpu_custom_call.1} parent=11 // pred_check
          %p433 = pneg %p59
        $region14: #{tpu_custom_call.1} parent=11 // pred_check_branch
          %435 = sbr.rel (%p433) target = $region16
        $region15: #{tpu_custom_call.1} parent=11 // pred_region
          %s436 = smul.u32 2, %s30
          %p437 = scmp.lt.s32.totalorder %s436, 1
          %s438 = scalar_select %p437, %s436, 1
          %s439 = smul.addr %s438, 2
          %s440 = smul.addr %s439, 8
          %s441 = scalar_lea.vmem %s0, %s440
          %s442 = smul.u32 2, %s30
        $region16: #{tpu_custom_call.1} parent=11 // pred_fallthru
          _
        // Predicated region
        $region17: #{tpu_custom_call.1} parent=11 // pred_check
          %p443 = pneg %p80
        $region18: #{tpu_custom_call.1} parent=11 // pred_check_branch
          %445 = sbr.rel (%p443) target = $region20
        $region19: #{tpu_custom_call.1} parent=11 // pred_region
          _
        $region20: #{tpu_custom_call.1} parent=11 // pred_fallthru
          _
      $region12: #{tpu_custom_call.1} parent=5 // pred_fallthru
        _
      %p446 = scmp.lt.s32.totalorder %s21, 2
      // Predicated region
      $region21: #{tpu_custom_call.1} parent=5 // pred_check
        %p447 = pneg %p446
      $region22: #{tpu_custom_call.1} parent=5 // pred_check_branch
        %449 = sbr.rel (%p447) target = $region24
      $region23: #{tpu_custom_call.1} parent=5 // pred_region
        // Predicated region
        $region25: #{tpu_custom_call.1} parent=23 // pred_check
          %p450 = pneg %p100
        $region26: #{tpu_custom_call.1} parent=23 // pred_check_branch
          %452 = sbr.rel (%p450) target = $region28
        $region27: #{tpu_custom_call.1} parent=23 // pred_region
          %p453 = scmp.lt.s32.totalorder %s29, 1
          %s454 = scalar_select %p453, %s29, 1
          %s455 = scalar_lea.vmem %s2, %s454
        $region28: #{tpu_custom_call.1} parent=23 // pred_fallthru
          _
        // Predicated region
        $region29: #{tpu_custom_call.1} parent=23 // pred_check
          %p456 = pneg %p126
        $region30: #{tpu_custom_call.1} parent=23 // pred_check_branch
          %458 = sbr.rel (%p456) target = $region32
        $region31: #{tpu_custom_call.1} parent=23 // pred_region
          %p459 = scmp.lt.s32.totalorder %s29, 1
          %s460 = scalar_select %p459, %s29, 1
          %s461 = scalar_lea.vmem %s3, %s460
        $region32: #{tpu_custom_call.1} parent=23 // pred_fallthru
          _
        // Predicated region
        $region33: #{tpu_custom_call.1} parent=23 // pred_check
          %p462 = pneg %p152
        $region34: #{tpu_custom_call.1} parent=23 // pred_check_branch
          %464 = sbr.rel (%p462) target = $region36
        $region35: #{tpu_custom_call.1} parent=23 // pred_region
          %p465 = scmp.lt.s32.totalorder %s29, 1
          %s466 = scalar_select %p465, %s29, 1
          %s467 = smul.addr %s466, 4
          %s468 = smul.addr %s467, 4
          %s469 = scalar_lea.vmem %s4, %s468
        $region36: #{tpu_custom_call.1} parent=23 // pred_fallthru
          _
        // Predicated region
        $region37: #{tpu_custom_call.1} parent=23 // pred_check
          %p470 = pneg %p178
        $region38: #{tpu_custom_call.1} parent=23 // pred_check_branch
          %472 = sbr.rel (%p470) target = $region40
        $region39: #{tpu_custom_call.1} parent=23 // pred_region
          %p473 = scmp.lt.s32.totalorder %s29, 1
          %s474 = scalar_select %p473, %s29, 1
          %s475 = scalar_lea.vmem %s5, %s474
        $region40: #{tpu_custom_call.1} parent=23 // pred_fallthru
          _
        // Predicated region
        $region41: #{tpu_custom_call.1} parent=23 // pred_check
          %p476 = pneg %p204
        $region42: #{tpu_custom_call.1} parent=23 // pred_check_branch
          %478 = sbr.rel (%p476) target = $region44
        $region43: #{tpu_custom_call.1} parent=23 // pred_region
          %p479 = scmp.lt.s32.totalorder %s29, 1
          %s480 = scalar_select %p479, %s29, 1
          %s481 = smul.addr %s480, 4
          %s482 = smul.addr %s481, 4
          %s483 = scalar_lea.vmem %s6, %s482
        $region44: #{tpu_custom_call.1} parent=23 // pred_fallthru
          _
        // Predicated region
        $region45: #{tpu_custom_call.1} parent=23 // pred_check
          %p484 = pneg %p230
        $region46: #{tpu_custom_call.1} parent=23 // pred_check_branch
          %486 = sbr.rel (%p484) target = $region48
        $region47: #{tpu_custom_call.1} parent=23 // pred_region
          %p487 = scmp.lt.s32.totalorder %s29, 1
          %s488 = scalar_select %p487, %s29, 1
          %s489 = scalar_lea.vmem %s7, %s488
        $region48: #{tpu_custom_call.1} parent=23 // pred_fallthru
          _
        // Predicated region
        $region49: #{tpu_custom_call.1} parent=23 // pred_check
          %p490 = pneg %p256
        $region50: #{tpu_custom_call.1} parent=23 // pred_check_branch
          %492 = sbr.rel (%p490) target = $region52
        $region51: #{tpu_custom_call.1} parent=23 // pred_region
          %p493 = scmp.lt.s32.totalorder %s29, 1
          %s494 = scalar_select %p493, %s29, 1
          %s495 = scalar_lea.vmem %s8, %s494
        $region52: #{tpu_custom_call.1} parent=23 // pred_fallthru
          _
        // Predicated region
        $region53: #{tpu_custom_call.1} parent=23 // pred_check
          %p496 = pneg %p282
        $region54: #{tpu_custom_call.1} parent=23 // pred_check_branch
          %498 = sbr.rel (%p496) target = $region56
        $region55: #{tpu_custom_call.1} parent=23 // pred_region
          %p499 = scmp.lt.s32.totalorder %s29, 1
          %s500 = scalar_select %p499, %s29, 1
          %s501 = scalar_lea.vmem %s9, %s500
        $region56: #{tpu_custom_call.1} parent=23 // pred_fallthru
          _
        // Predicated region
        $region57: #{tpu_custom_call.1} parent=23 // pred_check
          %p502 = pneg %p308
        $region58: #{tpu_custom_call.1} parent=23 // pred_check_branch
          %504 = sbr.rel (%p502) target = $region60
        $region59: #{tpu_custom_call.1} parent=23 // pred_region
          %p505 = scmp.lt.s32.totalorder %s29, 1
          %s506 = scalar_select %p505, %s29, 1
          %s507 = smul.addr %s506, 4
          %s508 = smul.addr %s507, 4
          %s509 = scalar_lea.vmem %s10, %s508
        $region60: #{tpu_custom_call.1} parent=23 // pred_fallthru
          _
        // Predicated region
        $region61: #{tpu_custom_call.1} parent=23 // pred_check
          %p510 = pneg %p334
        $region62: #{tpu_custom_call.1} parent=23 // pred_check_branch
          %512 = sbr.rel (%p510) target = $region64
        $region63: #{tpu_custom_call.1} parent=23 // pred_region
          %p513 = scmp.lt.s32.totalorder %s29, 1
          %s514 = scalar_select %p513, %s29, 1
          %s515 = scalar_lea.vmem %s11, %s514
        $region64: #{tpu_custom_call.1} parent=23 // pred_fallthru
          _
        // Predicated region
        $region65: #{tpu_custom_call.1} parent=23 // pred_check
          %p516 = pneg %p360
        $region66: #{tpu_custom_call.1} parent=23 // pred_check_branch
          %518 = sbr.rel (%p516) target = $region68
        $region67: #{tpu_custom_call.1} parent=23 // pred_region
          %p519 = scmp.lt.s32.totalorder %s29, 1
          %s520 = scalar_select %p519, %s29, 1
          %s521 = smul.addr %s520, 16
          %s522 = smul.addr %s521, 4
          %s523 = scalar_lea.vmem %s12, %s522
        $region68: #{tpu_custom_call.1} parent=23 // pred_fallthru
          _
        // Predicated region
        $region69: #{tpu_custom_call.1} parent=23 // pred_check
          %p524 = pneg %p386
        $region70: #{tpu_custom_call.1} parent=23 // pred_check_branch
          %526 = sbr.rel (%p524) target = $region72
        $region71: #{tpu_custom_call.1} parent=23 // pred_region
          %p527 = scmp.lt.s32.totalorder %s29, 1
          %s528 = scalar_select %p527, %s29, 1
          %s529 = scalar_lea.vmem %s13, %s528
        $region72: #{tpu_custom_call.1} parent=23 // pred_fallthru
          _
      $region24: #{tpu_custom_call.1} parent=5 // pred_fallthru
        _
      %p530 = scmp.le.s32.totalorder 1, %s21
      %p531 = scmp.lt.s32.totalorder %s21, 3
      %p532 = pnand %p530, %p531
      %p533 = pneg %p532
      // Predicated region
      $region73: #{tpu_custom_call.1} parent=5 // pred_check
        _
      $region74: #{tpu_custom_call.1} parent=5 // pred_check_branch
        %535 = sbr.rel (%p532) target = $region76
      $region75: #{tpu_custom_call.1} parent=5 // pred_region
        %s536 = ssub.s32 %s21, 1
        %s537 = smul.u32 2, %s30
        %p538 = scmp.lt.s32.totalorder %s537, 1
        %s539 = scalar_select %p538, %s537, 1
        %s540 = smul.addr %s539, 2
        %s541 = smul.addr %s540, 8
        %s542 = scalar_lea.vmem %s0, %s541
        %p543 = pneg %p59
        %p544 = pneg %p56
        %p545 = pneg %p80
        %p546 = pneg %p77
        %p547 = scmp.lt.s32.totalorder %s31, 1
        %s548 = scalar_select %p547, %s31, 1
        %s549 = scalar_lea.vmem %s2, %s548
        %p550 = pneg %p106
        %p551 = pneg %p103
        %p552 = scmp.lt.s32.totalorder %s31, 1
        %s553 = scalar_select %p552, %s31, 1
        %s554 = scalar_lea.vmem %s3, %s553
        %p555 = pneg %p132
        %p556 = pneg %p129
        %p557 = scmp.lt.s32.totalorder %s31, 1
        %s558 = scalar_select %p557, %s31, 1
        %s559 = smul.addr %s558, 4
        %s560 = smul.addr %s559, 4
        %s561 = scalar_lea.vmem %s4, %s560
        %p562 = pneg %p158
        %p563 = pneg %p155
        %p564 = scmp.lt.s32.totalorder %s31, 1
        %s565 = scalar_select %p564, %s31, 1
        %s566 = scalar_lea.vmem %s5, %s565
        %p567 = pneg %p184
        %p568 = pneg %p181
        %p569 = scmp.lt.s32.totalorder %s31, 1
        %s570 = scalar_select %p569, %s31, 1
        %s571 = smul.addr %s570, 4
        %s572 = smul.addr %s571, 4
        %s573 = scalar_lea.vmem %s6, %s572
        %p574 = pneg %p210
        %p575 = pneg %p207
        %p576 = scmp.lt.s32.totalorder %s31, 1
        %s577 = scalar_select %p576, %s31, 1
        %s578 = scalar_lea.vmem %s7, %s577
        %p579 = pneg %p236
        %p580 = pneg %p233
        %p581 = scmp.lt.s32.totalorder %s31, 1
        %s582 = scalar_select %p581, %s31, 1
        %s583 = scalar_lea.vmem %s8, %s582
        %p584 = pneg %p262
        %p585 = pneg %p259
        %p586 = scmp.lt.s32.totalorder %s31, 1
        %s587 = scalar_select %p586, %s31, 1
        %s588 = scalar_lea.vmem %s9, %s587
        %p589 = pneg %p288
        %p590 = pneg %p285
        %p591 = scmp.lt.s32.totalorder %s31, 1
        %s592 = scalar_select %p591, %s31, 1
        %s593 = smul.addr %s592, 4
        %s594 = smul.addr %s593, 4
        %s595 = scalar_lea.vmem %s10, %s594
        %p596 = pneg %p314
        %p597 = pneg %p311
        %p598 = scmp.lt.s32.totalorder %s31, 1
        %s599 = scalar_select %p598, %s31, 1
        %s600 = scalar_lea.vmem %s11, %s599
        %p601 = pneg %p340
        %p602 = pneg %p337
        %p603 = scmp.lt.s32.totalorder %s31, 1
        %s604 = scalar_select %p603, %s31, 1
        %s605 = smul.addr %s604, 16
        %s606 = smul.addr %s605, 4
        %s607 = scalar_lea.vmem %s12, %s606
        %p608 = pneg %p366
        %p609 = pneg %p363
        %p610 = scmp.lt.s32.totalorder %s31, 1
        %s611 = scalar_select %p610, %s31, 1
        %s612 = scalar_lea.vmem %s13, %s611
        %p613 = pneg %p392
        %p614 = pneg %p389
        %p615 = pneg %p418
        %p616 = pneg %p415
        %s617 = smul.u32 2, %s30
        %p618 = scmp.lt.s32.totalorder %s617, 1
        %s619 = scalar_select %p618, %s617, 1
        %s620 = smul.addr %s619, 2
        %s621 = smul.addr %s620, 8
        %s622 = scalar_lea.vmem %s0, %s621
        %s623 = smul.u32 2, %s30
        %p624 = scmp.lt.s32.totalorder %s31, 1
        %s625 = scalar_select %p624, %s31, 1
        %s626 = scalar_lea.vmem %s2, %s625
        %p627 = scmp.lt.s32.totalorder %s31, 1
        %s628 = scalar_select %p627, %s31, 1
        %s629 = scalar_lea.vmem %s3, %s628
        %p630 = scmp.lt.s32.totalorder %s31, 1
        %s631 = scalar_select %p630, %s31, 1
        %s632 = smul.addr %s631, 4
        %s633 = smul.addr %s632, 4
        %s634 = scalar_lea.vmem %s4, %s633
        %p635 = scmp.lt.s32.totalorder %s31, 1
        %s636 = scalar_select %p635, %s31, 1
        %s637 = scalar_lea.vmem %s5, %s636
        %p638 = scmp.lt.s32.totalorder %s31, 1
        %s639 = scalar_select %p638, %s31, 1
        %s640 = smul.addr %s639, 4
        %s641 = smul.addr %s640, 4
        %s642 = scalar_lea.vmem %s6, %s641
        %p643 = scmp.lt.s32.totalorder %s31, 1
        %s644 = scalar_select %p643, %s31, 1
        %s645 = scalar_lea.vmem %s7, %s644
        %p646 = scmp.lt.s32.totalorder %s31, 1
        %s647 = scalar_select %p646, %s31, 1
        %s648 = scalar_lea.vmem %s8, %s647
        %p649 = scmp.lt.s32.totalorder %s31, 1
        %s650 = scalar_select %p649, %s31, 1
        %s651 = scalar_lea.vmem %s9, %s650
        %p652 = scmp.lt.s32.totalorder %s31, 1
        %s653 = scalar_select %p652, %s31, 1
        %s654 = smul.addr %s653, 4
        %s655 = smul.addr %s654, 4
        %s656 = scalar_lea.vmem %s10, %s655
        %p657 = scmp.lt.s32.totalorder %s31, 1
        %s658 = scalar_select %p657, %s31, 1
        %s659 = scalar_lea.vmem %s11, %s658
        %p660 = scmp.lt.s32.totalorder %s31, 1
        %s661 = scalar_select %p660, %s31, 1
        %s662 = smul.addr %s661, 16
        %s663 = smul.addr %s662, 4
        %s664 = scalar_lea.vmem %s12, %s663
        %p665 = scmp.lt.s32.totalorder %s31, 1
        %s666 = scalar_select %p665, %s31, 1
        %s667 = scalar_lea.vmem %s13, %s666
        %s668 = smul.u32 2, %s30
        %p670 = scmp.eq.s32.totalorder %s31, 0
        // Predicated region
        $region77: #{tpu_custom_call.1} parent=75 // pred_check
          %p671 = pneg %p670
        $region78: #{tpu_custom_call.1} parent=75 // pred_check_branch
          %673 = sbr.rel (%p671) target = $region80
        $region79: #{tpu_custom_call.1} parent=75 // pred_region
          %v674 = vld [vmem:[%s622] sm:$0xff]
          %v675 = vld [vmem:[%s622 + $0x8] sm:$0xff]
          %v676 = vld [vmem:[%s622 + $0x10] sm:$0xff]
          %v677 = vld [vmem:[%s622 + $0x18] sm:$0xff]
          %vm678 = vcmask 261120
          %679 = vst.msk [vmem:[#allocation2] sm:$0xff] %vm678, %v674
          %680 = vst.msk [vmem:[#allocation2 + $0x8] sm:$0xff] %vm678, %v675
          %681 = vst.msk [vmem:[#allocation2 + $0x10] sm:$0xff] %vm678, %v676
          %682 = vst.msk [vmem:[#allocation2 + $0x18] sm:$0xff] %vm678, %v677
        $region80: #{tpu_custom_call.1} parent=75 // pred_fallthru
          _
        %v683 = vld [vmem:[#allocation2] sm:$0xff]
        %v684 = vld [vmem:[#allocation2 + $0x8] sm:$0xff]
        %v685 = vld [vmem:[#allocation2 + $0x10] sm:$0xff]
        %v686 = vld [vmem:[#allocation2 + $0x18] sm:$0xff]
        %v687 = vld [vmem:[%s626] sm:$0x1]
        %v688 = vld [vmem:[%s629] sm:$0x1]
        %vm689 = vcmask 261120
        %v690 = vsel %vm689, %v683, 0.0
        %691 = vadd.xlane.f32.xlu0 %v690
        %v692 = vpop.xlane.xlu0 %691
        %v693 = vsel %vm689, %v684, 0.0
        %694 = vadd.xlane.f32.xlu0 %v693
        %v695 = vpop.xlane.xlu0 %694
        %v696 = vsel %vm689, %v685, 0.0
        %697 = vadd.xlane.f32.xlu0 %v696
        %v698 = vpop.xlane.xlu0 %697
        %v699 = vsel %vm689, %v686, 0.0
        %700 = vadd.xlane.f32.xlu0 %v699
        %v701 = vpop.xlane.xlu0 %700
        %v702 = vrcp.pop 32.0
        %v703 = vmul.f32 %v692, %v702
        %v704 = vmul.f32 %v695, %v702
        %v705 = vmul.f32 %v698, %v702
        %v706 = vmul.f32 %v701, %v702
        %v707 = vsub.f32 %v683, %v703
        %v708 = vsub.f32 %v684, %v704
        %v709 = vsub.f32 %v685, %v705
        %v710 = vsub.f32 %v686, %v706
        %v711 = vmul.f32 %v707, %v707
        %v712 = vmul.f32 %v708, %v708
        %v713 = vmul.f32 %v709, %v709
        %v714 = vmul.f32 %v710, %v710
        %v715 = vsel %vm689, %v711, 0.0
        %716 = vadd.xlane.f32.xlu0 %v715
        %v717 = vpop.xlane.xlu0 %716
        %v718 = vsel %vm689, %v712, 0.0
        %719 = vadd.xlane.f32.xlu0 %v718
        %v720 = vpop.xlane.xlu0 %719
        %v721 = vsel %vm689, %v713, 0.0
        %722 = vadd.xlane.f32.xlu0 %v721
        %v723 = vpop.xlane.xlu0 %722
        %v724 = vsel %vm689, %v714, 0.0
        %725 = vadd.xlane.f32.xlu0 %v724
        %v726 = vpop.xlane.xlu0 %725
        %v727 = vmul.f32 %v717, %v702
        %v728 = vmul.f32 %v720, %v702
        %v729 = vmul.f32 %v723, %v702
        %v730 = vmul.f32 %v726, %v702
        %v731 = vadd.f32 %v727, 1e-05
        %v732 = vadd.f32 %v728, 1e-05
        %v733 = vadd.f32 %v729, 1e-05
        %v734 = vadd.f32 %v730, 1e-05
        %v735 = vrsqrt.pop %v731
        %v736 = vrsqrt.pop %v732
        %v737 = vrsqrt.pop %v733
        %v738 = vrsqrt.pop %v734
        %v739 = vmul.f32 %v707, %v735
        %v740 = vmul.f32 %v708, %v736
        %v741 = vmul.f32 %v709, %v737
        %v742 = vmul.f32 %v710, %v738
        %v744 = vlaneseq
        %v745 = vshrl.u32 %v744, 7
        %v746 = vsub.s32 0, %v745
        %v747 = vrot.slane %v687, %v746
        %v749 = vmul.f32 %v739, %v747
        %v750 = vmul.f32 %v740, %v747
        %v751 = vmul.f32 %v741, %v747
        %v752 = vmul.f32 %v742, %v747
        %v754 = vlaneseq
        %v755 = vshrl.u32 %v754, 7
        %v756 = vsub.s32 0, %v755
        %v757 = vrot.slane %v688, %v756
        %v759 = vadd.f32 %v749, %v757
        %v760 = vadd.f32 %v750, %v757
        %v761 = vadd.f32 %v751, %v757
        %v762 = vadd.f32 %v752, %v757
        %v763 = vpack.c.bf16 %v760, %v759
        %v764 = vpack.c.bf16 %v762, %v761
        %v765 = vld [vmem:[%s634] sm:$0xf]
        %v766 = vld [vmem:[%s634 + $0x4] sm:$0xf]
        %v767 = vld [vmem:[%s634 + $0x8] sm:$0xf]
        %v768 = vld [vmem:[%s634 + $0xc] sm:$0xf]
        %v769 = vld [vmem:[%s637] sm:$0x1]
        %v771 = vlaneseq
        %v772 = vshrl.u32 %v771, 7
        %v773 = vsub.s32 0, %v772
        %v774 = vrot.slane %v769, %v773
        %v780 = vunpack.c.l.b16 %v765
        %v781 = vunpack.c.l.b16 %v766
        %v782 = vunpack.c.l.b16 %v767
        %v783 = vunpack.c.l.b16 %v768
        %v784 = vpack.c.b16 %v781, %v780
        %v785 = vpack.c.b16 %v783, %v782
        %v789 = vsel %vm689, %v763, 0
        %v792 = vsel %vm689, %v764, 0
        %794 = vmatprep.subr.bf16.mxu0 0
        %795 = vmatpush1.bf16.msra.mxu0 0
        %796 = vmatprep.subr.bf16.mxu0 0
        %797 = vmatpush1.bf16.msra.mxu0 0
        %798 = vmatprep.subr.bf16.mxu0 0
        %799 = vmatpush1.bf16.msra.mxu0 0
        %800 = vmatprep.subr.bf16.mxu0 0
        %801 = vmatpush1.bf16.msra.mxu0 0
        %802 = vmatprep.subr.bf16.mxu0 0
        %803 = vmatpush1.bf16.msra.mxu0 0
        %804 = vmatprep.subr.bf16.mxu0 0
        %805 = vmatpush1.bf16.msra.mxu0 0
        %806 = vmatprep.subr.bf16.mxu0 0
        %807 = vmatpush1.bf16.msra.mxu0 %v785
        %808 = vmatprep.subr.bf16.mxu0 0
        %809 = vmatpush1.bf16.msra.mxu0 %v784
        %810 = vmatprep.subr.bf16.mxu0 0
        %811 = vmatpush2.bf16.msra.mxu0 0
        %812 = vmatprep.subr.bf16.mxu0 0
        %813 = vmatpush2.bf16.msra.mxu0 0
        %814 = vmatprep.subr.bf16.mxu0 0
        %815 = vmatpush2.bf16.msra.mxu0 0
        %816 = vmatprep.subr.bf16.mxu0 0
        %817 = vmatpush2.bf16.msra.mxu0 0
        %818 = vmatprep.subr.bf16.mxu0 0
        %819 = vmatpush2.bf16.msra.mxu0 0
        %820 = vmatprep.subr.bf16.mxu0 0
        %821 = vmatpush2.bf16.msra.mxu0 0
        %822 = vmatprep.subr.bf16.mxu0 0
        %823 = vmatpush2.bf16.msra.mxu0 0
        %824 = vmatprep.subr.bf16.mxu0 0
        %825 = vmatpush2.bf16.msra.mxu0 0
        %826 = vmatprep.mubr.bf16.mxu0 0
        %827 = vmatmul.mubr.bf16.gmra.mxu0 %v789
        %v828 = vpop.f32.mrf.mxu0
        %v829 = vadd.f32 %v774, %v828
        %v830 = vpop.f32.mrf.mxu0
        %v831 = vpop.f32.mrf.mxu0
        %v832 = vadd.f32 %v774, %v831
        %v833 = vpop.f32.mrf.mxu0
        %834 = vmatprep.mubr.bf16.mxu0 0
        %835 = vmatmul.mubr.bf16.gmra.mxu0 %v792
        %v836 = vpop.f32.mrf.mxu0
        %v837 = vadd.f32 %v774, %v836
        %v838 = vpop.f32.mrf.mxu0
        %v839 = vpop.f32.mrf.mxu0
        %v840 = vadd.f32 %v774, %v839
        %v841 = vpop.f32.mrf.mxu0
        %842 = vdwg.mxu0
        %v843 = vpack.c.bf16 %v832, %v829
        %v844 = vpack.c.bf16 %v840, %v837
        %847 = vrot.lane.b32.xlu0 %v843, 120
        %v848 = vpop.permute.xlu0 %847
        %849 = vrot.lane.b32.xlu0 %v844, 120
        %v850 = vpop.permute.xlu0 %849
        %851 = vrot.lane.b32.xlu0 %v843, 112
        %v852 = vpop.permute.xlu0 %851
        %853 = vrot.lane.b32.xlu0 %v844, 112
        %v854 = vpop.permute.xlu0 %853
        %855 = vrot.lane.b32.xlu0 %v843, 104
        %v856 = vpop.permute.xlu0 %855
        %857 = vrot.lane.b32.xlu0 %v844, 104
        %v858 = vpop.permute.xlu0 %857
        %v859 = vld [vmem:[%s1] sm:$0xff]
        %v860 = vld [vmem:[%s1 + $0x8] sm:$0xff]
        %861 = vrot.lane.b32.xlu0 %v843, 96
        %v862 = vpop.permute.xlu0 %861
        %vm863 = vcmask 64512
        %v865 = vsel %vm863, %v843, 0
        %v868 = vsel %vm863, %v862, 0
        %870 = vmatprep.subr.bf16.mxu0 0
        %871 = vmatpush1.bf16.xpose.msra.mxu0 0
        %872 = vmatprep.subr.bf16.mxu0 0
        %873 = vmatpush1.bf16.xpose.msra.mxu0 0
        %874 = vmatprep.subr.bf16.mxu0 0
        %875 = vmatpush1.bf16.xpose.msra.mxu0 0
        %876 = vmatprep.subr.bf16.mxu0 0
        %877 = vmatpush1.bf16.xpose.msra.mxu0 0
        %878 = vmatprep.subr.bf16.mxu0 0
        %879 = vmatpush1.bf16.xpose.msra.mxu0 0
        %880 = vmatprep.subr.bf16.mxu0 0
        %881 = vmatpush1.bf16.xpose.msra.mxu0 0
        %882 = vmatprep.subr.bf16.mxu0 0
        %883 = vmatpush1.bf16.xpose.msra.mxu0 0
        %884 = vmatprep.subr.bf16.mxu0 0
        %885 = vmatpush1.bf16.xpose.msra.mxu0 %v868
        %886 = vmatprep.subr.bf16.mxu0 0
        %887 = vmatpush2.bf16.xpose.msra.mxu0 0
        %888 = vmatprep.subr.bf16.mxu0 0
        %889 = vmatpush2.bf16.xpose.msra.mxu0 0
        %890 = vmatprep.subr.bf16.mxu0 0
        %891 = vmatpush2.bf16.xpose.msra.mxu0 0
        %892 = vmatprep.subr.bf16.mxu0 0
        %893 = vmatpush2.bf16.xpose.msra.mxu0 0
        %894 = vmatprep.subr.bf16.mxu0 0
        %895 = vmatpush2.bf16.xpose.msra.mxu0 0
        %896 = vmatprep.subr.bf16.mxu0 0
        %897 = vmatpush2.bf16.xpose.msra.mxu0 0
        %898 = vmatprep.subr.bf16.mxu0 0
        %899 = vmatpush2.bf16.xpose.msra.mxu0 0
        %900 = vmatprep.subr.bf16.mxu0 0
        %901 = vmatpush2.bf16.xpose.msra.mxu0 0
        %902 = vmatprep.mubr.bf16.mxu0 0
        %903 = vmatmul.mubr.bf16.gmra.mxu0 %v865
        %v904 = vpop.f32.mrf.mxu0
        %v905 = vadd.f32 %v859, %v904
        %v906 = vpop.f32.mrf.mxu0
        %v907 = vpop.f32.mrf.mxu0
        %v908 = vadd.f32 %v860, %v907
        %v909 = vpop.f32.mrf.mxu0
        %910 = vdwg.mxu0
        %911 = vrot.lane.b32.xlu0 %v844, 96
        %v912 = vpop.permute.xlu0 %911
        %v914 = vsel %vm863, %v844, 0
        %v917 = vsel %vm863, %v912, 0
        %919 = vmatprep.subr.bf16.mxu0 0
        %920 = vmatpush1.bf16.xpose.msra.mxu0 0
        %921 = vmatprep.subr.bf16.mxu0 0
        %922 = vmatpush1.bf16.xpose.msra.mxu0 0
        %923 = vmatprep.subr.bf16.mxu0 0
        %924 = vmatpush1.bf16.xpose.msra.mxu0 0
        %925 = vmatprep.subr.bf16.mxu0 0
        %926 = vmatpush1.bf16.xpose.msra.mxu0 0
        %927 = vmatprep.subr.bf16.mxu0 0
        %928 = vmatpush1.bf16.xpose.msra.mxu0 0
        %929 = vmatprep.subr.bf16.mxu0 0
        %930 = vmatpush1.bf16.xpose.msra.mxu0 0
        %931 = vmatprep.subr.bf16.mxu0 0
        %932 = vmatpush1.bf16.xpose.msra.mxu0 0
        %933 = vmatprep.subr.bf16.mxu0 0
        %934 = vmatpush1.bf16.xpose.msra.mxu0 %v917
        %935 = vmatprep.subr.bf16.mxu0 0
        %936 = vmatpush2.bf16.xpose.msra.mxu0 0
        %937 = vmatprep.subr.bf16.mxu0 0
        %938 = vmatpush2.bf16.xpose.msra.mxu0 0
        %939 = vmatprep.subr.bf16.mxu0 0
        %940 = vmatpush2.bf16.xpose.msra.mxu0 0
        %941 = vmatprep.subr.bf16.mxu0 0
        %942 = vmatpush2.bf16.xpose.msra.mxu0 0
        %943 = vmatprep.subr.bf16.mxu0 0
        %944 = vmatpush2.bf16.xpose.msra.mxu0 0
        %945 = vmatprep.subr.bf16.mxu0 0
        %946 = vmatpush2.bf16.xpose.msra.mxu0 0
        %947 = vmatprep.subr.bf16.mxu0 0
        %948 = vmatpush2.bf16.xpose.msra.mxu0 0
        %949 = vmatprep.subr.bf16.mxu0 0
        %950 = vmatpush2.bf16.xpose.msra.mxu0 0
        %951 = vmatprep.mubr.bf16.mxu0 0
        %952 = vmatmul.mubr.bf16.gmra.mxu0 %v914
        %v953 = vpop.f32.mrf.mxu0
        %v954 = vadd.f32 %v859, %v953
        %v955 = vpop.f32.mrf.mxu0
        %v956 = vpop.f32.mrf.mxu0
        %v957 = vadd.f32 %v860, %v956
        %v958 = vpop.f32.mrf.mxu0
        %959 = vdwg.mxu0
        %960 = vrot.lane.b32.xlu0 %v848, 96
        %v961 = vpop.permute.xlu0 %960
        %v963 = vsel %vm863, %v848, 0
        %v966 = vsel %vm863, %v961, 0
        %968 = vmatprep.subr.bf16.mxu0 0
        %969 = vmatpush1.bf16.xpose.msra.mxu0 0
        %970 = vmatprep.subr.bf16.mxu0 0
        %971 = vmatpush1.bf16.xpose.msra.mxu0 0
        %972 = vmatprep.subr.bf16.mxu0 0
        %973 = vmatpush1.bf16.xpose.msra.mxu0 0
        %974 = vmatprep.subr.bf16.mxu0 0
        %975 = vmatpush1.bf16.xpose.msra.mxu0 0
        %976 = vmatprep.subr.bf16.mxu0 0
        %977 = vmatpush1.bf16.xpose.msra.mxu0 0
        %978 = vmatprep.subr.bf16.mxu0 0
        %979 = vmatpush1.bf16.xpose.msra.mxu0 0
        %980 = vmatprep.subr.bf16.mxu0 0
        %981 = vmatpush1.bf16.xpose.msra.mxu0 0
        %982 = vmatprep.subr.bf16.mxu0 0
        %983 = vmatpush1.bf16.xpose.msra.mxu0 %v966
        %984 = vmatprep.subr.bf16.mxu0 0
        %985 = vmatpush2.bf16.xpose.msra.mxu0 0
        %986 = vmatprep.subr.bf16.mxu0 0
        %987 = vmatpush2.bf16.xpose.msra.mxu0 0
        %988 = vmatprep.subr.bf16.mxu0 0
        %989 = vmatpush2.bf16.xpose.msra.mxu0 0
        %990 = vmatprep.subr.bf16.mxu0 0
        %991 = vmatpush2.bf16.xpose.msra.mxu0 0
        %992 = vmatprep.subr.bf16.mxu0 0
        %993 = vmatpush2.bf16.xpose.msra.mxu0 0
        %994 = vmatprep.subr.bf16.mxu0 0
        %995 = vmatpush2.bf16.xpose.msra.mxu0 0
        %996 = vmatprep.subr.bf16.mxu0 0
        %997 = vmatpush2.bf16.xpose.msra.mxu0 0
        %998 = vmatprep.subr.bf16.mxu0 0
        %999 = vmatpush2.bf16.xpose.msra.mxu0 0
        %1000 = vmatprep.mubr.bf16.mxu0 0
        %1001 = vmatmul.mubr.bf16.gmra.mxu0 %v963
        %v1002 = vpop.f32.mrf.mxu0
        %v1003 = vadd.f32 %v859, %v1002
        %v1004 = vpop.f32.mrf.mxu0
        %v1005 = vpop.f32.mrf.mxu0
        %v1006 = vadd.f32 %v860, %v1005
        %v1007 = vpop.f32.mrf.mxu0
        %1008 = vdwg.mxu0
        %1009 = vrot.lane.b32.xlu0 %v850, 96
        %v1010 = vpop.permute.xlu0 %1009
        %v1012 = vsel %vm863, %v850, 0
        %v1015 = vsel %vm863, %v1010, 0
        %1017 = vmatprep.subr.bf16.mxu0 0
        %1018 = vmatpush1.bf16.xpose.msra.mxu0 0
        %1019 = vmatprep.subr.bf16.mxu0 0
        %1020 = vmatpush1.bf16.xpose.msra.mxu0 0
        %1021 = vmatprep.subr.bf16.mxu0 0
        %1022 = vmatpush1.bf16.xpose.msra.mxu0 0
        %1023 = vmatprep.subr.bf16.mxu0 0
        %1024 = vmatpush1.bf16.xpose.msra.mxu0 0
        %1025 = vmatprep.subr.bf16.mxu0 0
        %1026 = vmatpush1.bf16.xpose.msra.mxu0 0
        %1027 = vmatprep.subr.bf16.mxu0 0
        %1028 = vmatpush1.bf16.xpose.msra.mxu0 0
        %1029 = vmatprep.subr.bf16.mxu0 0
        %1030 = vmatpush1.bf16.xpose.msra.mxu0 0
        %1031 = vmatprep.subr.bf16.mxu0 0
        %1032 = vmatpush1.bf16.xpose.msra.mxu0 %v1015
        %1033 = vmatprep.subr.bf16.mxu0 0
        %1034 = vmatpush2.bf16.xpose.msra.mxu0 0
        %1035 = vmatprep.subr.bf16.mxu0 0
        %1036 = vmatpush2.bf16.xpose.msra.mxu0 0
        %1037 = vmatprep.subr.bf16.mxu0 0
        %1038 = vmatpush2.bf16.xpose.msra.mxu0 0
        %1039 = vmatprep.subr.bf16.mxu0 0
        %1040 = vmatpush2.bf16.xpose.msra.mxu0 0
        %1041 = vmatprep.subr.bf16.mxu0 0
        %1042 = vmatpush2.bf16.xpose.msra.mxu0 0
        %1043 = vmatprep.subr.bf16.mxu0 0
        %1044 = vmatpush2.bf16.xpose.msra.mxu0 0
        %1045 = vmatprep.subr.bf16.mxu0 0
        %1046 = vmatpush2.bf16.xpose.msra.mxu0 0
        %1047 = vmatprep.subr.bf16.mxu0 0
        %1048 = vmatpush2.bf16.xpose.msra.mxu0 0
        %1049 = vmatprep.mubr.bf16.mxu0 0
        %1050 = vmatmul.mubr.bf16.gmra.mxu0 %v1012
        %v1051 = vpop.f32.mrf.mxu0
        %v1052 = vadd.f32 %v859, %v1051
        %v1053 = vpop.f32.mrf.mxu0
        %v1054 = vpop.f32.mrf.mxu0
        %v1055 = vadd.f32 %v860, %v1054
        %v1056 = vpop.f32.mrf.mxu0
        %1057 = vdwg.mxu0
        %1058 = vrot.lane.b32.xlu0 %v852, 96
        %v1059 = vpop.permute.xlu0 %1058
        %v1061 = vsel %vm863, %v852, 0
        %v1064 = vsel %vm863, %v1059, 0
        %1066 = vmatprep.subr.bf16.mxu0 0
        %1067 = vmatpush1.bf16.xpose.msra.mxu0 0
        %1068 = vmatprep.subr.bf16.mxu0 0
        %1069 = vmatpush1.bf16.xpose.msra.mxu0 0
        %1070 = vmatprep.subr.bf16.mxu0 0
        %1071 = vmatpush1.bf16.xpose.msra.mxu0 0
        %1072 = vmatprep.subr.bf16.mxu0 0
        %1073 = vmatpush1.bf16.xpose.msra.mxu0 0
        %1074 = vmatprep.subr.bf16.mxu0 0
        %1075 = vmatpush1.bf16.xpose.msra.mxu0 0
        %1076 = vmatprep.subr.bf16.mxu0 0
        %1077 = vmatpush1.bf16.xpose.msra.mxu0 0
        %1078 = vmatprep.subr.bf16.mxu0 0
        %1079 = vmatpush1.bf16.xpose.msra.mxu0 0
        %1080 = vmatprep.subr.bf16.mxu0 0
        %1081 = vmatpush1.bf16.xpose.msra.mxu0 %v1064
        %1082 = vmatprep.subr.bf16.mxu0 0
        %1083 = vmatpush2.bf16.xpose.msra.mxu0 0
        %1084 = vmatprep.subr.bf16.mxu0 0
        %1085 = vmatpush2.bf16.xpose.msra.mxu0 0
        %1086 = vmatprep.subr.bf16.mxu0 0
        %1087 = vmatpush2.bf16.xpose.msra.mxu0 0
        %1088 = vmatprep.subr.bf16.mxu0 0
        %1089 = vmatpush2.bf16.xpose.msra.mxu0 0
        %1090 = vmatprep.subr.bf16.mxu0 0
        %1091 = vmatpush2.bf16.xpose.msra.mxu0 0
        %1092 = vmatprep.subr.bf16.mxu0 0
        %1093 = vmatpush2.bf16.xpose.msra.mxu0 0
        %1094 = vmatprep.subr.bf16.mxu0 0
        %1095 = vmatpush2.bf16.xpose.msra.mxu0 0
        %1096 = vmatprep.subr.bf16.mxu0 0
        %1097 = vmatpush2.bf16.xpose.msra.mxu0 0
        %1098 = vmatprep.mubr.bf16.mxu0 0
        %1099 = vmatmul.mubr.bf16.gmra.mxu0 %v1061
        %v1100 = vpop.f32.mrf.mxu0
        %v1101 = vadd.f32 %v859, %v1100
        %v1102 = vpop.f32.mrf.mxu0
        %v1103 = vpop.f32.mrf.mxu0
        %v1104 = vadd.f32 %v860, %v1103
        %v1105 = vpop.f32.mrf.mxu0
        %1106 = vdwg.mxu0
        %1107 = vrot.lane.b32.xlu0 %v854, 96
        %v1108 = vpop.permute.xlu0 %1107
        %v1110 = vsel %vm863, %v854, 0
        %v1113 = vsel %vm863, %v1108, 0
        %1115 = vmatprep.subr.bf16.mxu0 0
        %1116 = vmatpush1.bf16.xpose.msra.mxu0 0
        %1117 = vmatprep.subr.bf16.mxu0 0
        %1118 = vmatpush1.bf16.xpose.msra.mxu0 0
        %1119 = vmatprep.subr.bf16.mxu0 0
        %1120 = vmatpush1.bf16.xpose.msra.mxu0 0
        %1121 = vmatprep.subr.bf16.mxu0 0
        %1122 = vmatpush1.bf16.xpose.msra.mxu0 0
        %1123 = vmatprep.subr.bf16.mxu0 0
        %1124 = vmatpush1.bf16.xpose.msra.mxu0 0
        %1125 = vmatprep.subr.bf16.mxu0 0
        %1126 = vmatpush1.bf16.xpose.msra.mxu0 0
        %1127 = vmatprep.subr.bf16.mxu0 0
        %1128 = vmatpush1.bf16.xpose.msra.mxu0 0
        %1129 = vmatprep.subr.bf16.mxu0 0
        %1130 = vmatpush1.bf16.xpose.msra.mxu0 %v1113
        %1131 = vmatprep.subr.bf16.mxu0 0
        %1132 = vmatpush2.bf16.xpose.msra.mxu0 0
        %1133 = vmatprep.subr.bf16.mxu0 0
        %1134 = vmatpush2.bf16.xpose.msra.mxu0 0
        %1135 = vmatprep.subr.bf16.mxu0 0
        %1136 = vmatpush2.bf16.xpose.msra.mxu0 0
        %1137 = vmatprep.subr.bf16.mxu0 0
        %1138 = vmatpush2.bf16.xpose.msra.mxu0 0
        %1139 = vmatprep.subr.bf16.mxu0 0
        %1140 = vmatpush2.bf16.xpose.msra.mxu0 0
        %1141 = vmatprep.subr.bf16.mxu0 0
        %1142 = vmatpush2.bf16.xpose.msra.mxu0 0
        %1143 = vmatprep.subr.bf16.mxu0 0
        %1144 = vmatpush2.bf16.xpose.msra.mxu0 0
        %1145 = vmatprep.subr.bf16.mxu0 0
        %1146 = vmatpush2.bf16.xpose.msra.mxu0 0
        %1147 = vmatprep.mubr.bf16.mxu0 0
        %1148 = vmatmul.mubr.bf16.gmra.mxu0 %v1110
        %v1149 = vpop.f32.mrf.mxu0
        %v1150 = vadd.f32 %v859, %v1149
        %v1151 = vpop.f32.mrf.mxu0
        %v1152 = vpop.f32.mrf.mxu0
        %v1153 = vadd.f32 %v860, %v1152
        %v1154 = vpop.f32.mrf.mxu0
        %1155 = vdwg.mxu0
        %1156 = vrot.lane.b32.xlu0 %v856, 96
        %v1157 = vpop.permute.xlu0 %1156
        %v1159 = vsel %vm863, %v856, 0
        %v1162 = vsel %vm863, %v1157, 0
        %1164 = vmatprep.subr.bf16.mxu0 0
        %1165 = vmatpush1.bf16.xpose.msra.mxu0 0
        %1166 = vmatprep.subr.bf16.mxu0 0
        %1167 = vmatpush1.bf16.xpose.msra.mxu0 0
        %1168 = vmatprep.subr.bf16.mxu0 0
        %1169 = vmatpush1.bf16.xpose.msra.mxu0 0
        %1170 = vmatprep.subr.bf16.mxu0 0
        %1171 = vmatpush1.bf16.xpose.msra.mxu0 0
        %1172 = vmatprep.subr.bf16.mxu0 0
        %1173 = vmatpush1.bf16.xpose.msra.mxu0 0
        %1174 = vmatprep.subr.bf16.mxu0 0
        %1175 = vmatpush1.bf16.xpose.msra.mxu0 0
        %1176 = vmatprep.subr.bf16.mxu0 0
        %1177 = vmatpush1.bf16.xpose.msra.mxu0 0
        %1178 = vmatprep.subr.bf16.mxu0 0
        %1179 = vmatpush1.bf16.xpose.msra.mxu0 %v1162
        %1180 = vmatprep.subr.bf16.mxu0 0
        %1181 = vmatpush2.bf16.xpose.msra.mxu0 0
        %1182 = vmatprep.subr.bf16.mxu0 0
        %1183 = vmatpush2.bf16.xpose.msra.mxu0 0
        %1184 = vmatprep.subr.bf16.mxu0 0
        %1185 = vmatpush2.bf16.xpose.msra.mxu0 0
        %1186 = vmatprep.subr.bf16.mxu0 0
        %1187 = vmatpush2.bf16.xpose.msra.mxu0 0
        %1188 = vmatprep.subr.bf16.mxu0 0
        %1189 = vmatpush2.bf16.xpose.msra.mxu0 0
        %1190 = vmatprep.subr.bf16.mxu0 0
        %1191 = vmatpush2.bf16.xpose.msra.mxu0 0
        %1192 = vmatprep.subr.bf16.mxu0 0
        %1193 = vmatpush2.bf16.xpose.msra.mxu0 0
        %1194 = vmatprep.subr.bf16.mxu0 0
        %1195 = vmatpush2.bf16.xpose.msra.mxu0 0
        %1196 = vmatprep.mubr.bf16.mxu0 0
        %1197 = vmatmul.mubr.bf16.gmra.mxu0 %v1159
        %v1198 = vpop.f32.mrf.mxu0
        %v1199 = vadd.f32 %v859, %v1198
        %v1200 = vpop.f32.mrf.mxu0
        %v1201 = vpop.f32.mrf.mxu0
        %v1202 = vadd.f32 %v860, %v1201
        %v1203 = vpop.f32.mrf.mxu0
        %1204 = vdwg.mxu0
        %1205 = vrot.lane.b32.xlu0 %v858, 96
        %v1206 = vpop.permute.xlu0 %1205
        %v1208 = vsel %vm863, %v858, 0
        %v1211 = vsel %vm863, %v1206, 0
        %1213 = vmatprep.subr.bf16.mxu0 0
        %1214 = vmatpush1.bf16.xpose.msra.mxu0 0
        %1215 = vmatprep.subr.bf16.mxu0 0
        %1216 = vmatpush1.bf16.xpose.msra.mxu0 0
        %1217 = vmatprep.subr.bf16.mxu0 0
        %1218 = vmatpush1.bf16.xpose.msra.mxu0 0
        %1219 = vmatprep.subr.bf16.mxu0 0
        %1220 = vmatpush1.bf16.xpose.msra.mxu0 0
        %1221 = vmatprep.subr.bf16.mxu0 0
        %1222 = vmatpush1.bf16.xpose.msra.mxu0 0
        %1223 = vmatprep.subr.bf16.mxu0 0
        %1224 = vmatpush1.bf16.xpose.msra.mxu0 0
        %1225 = vmatprep.subr.bf16.mxu0 0
        %1226 = vmatpush1.bf16.xpose.msra.mxu0 0
        %1227 = vmatprep.subr.bf16.mxu0 0
        %1228 = vmatpush1.bf16.xpose.msra.mxu0 %v1211
        %1229 = vmatprep.subr.bf16.mxu0 0
        %1230 = vmatpush2.bf16.xpose.msra.mxu0 0
        %1231 = vmatprep.subr.bf16.mxu0 0
        %1232 = vmatpush2.bf16.xpose.msra.mxu0 0
        %1233 = vmatprep.subr.bf16.mxu0 0
        %1234 = vmatpush2.bf16.xpose.msra.mxu0 0
        %1235 = vmatprep.subr.bf16.mxu0 0
        %1236 = vmatpush2.bf16.xpose.msra.mxu0 0
        %1237 = vmatprep.subr.bf16.mxu0 0
        %1238 = vmatpush2.bf16.xpose.msra.mxu0 0
        %1239 = vmatprep.subr.bf16.mxu0 0
        %1240 = vmatpush2.bf16.xpose.msra.mxu0 0
        %1241 = vmatprep.subr.bf16.mxu0 0
        %1242 = vmatpush2.bf16.xpose.msra.mxu0 0
        %1243 = vmatprep.subr.bf16.mxu0 0
        %1244 = vmatpush2.bf16.xpose.msra.mxu0 0
        %1245 = vmatprep.mubr.bf16.mxu0 0
        %1246 = vmatmul.mubr.bf16.gmra.mxu0 %v1208
        %v1247 = vpop.f32.mrf.mxu0
        %v1248 = vadd.f32 %v859, %v1247
        %v1249 = vpop.f32.mrf.mxu0
        %v1250 = vpop.f32.mrf.mxu0
        %v1251 = vadd.f32 %v860, %v1250
        %v1252 = vpop.f32.mrf.mxu0
        %1253 = vdwg.mxu0
        %vm1254 = vcmask 130048
        %v1255 = vsel %vm1254, %v905, -inf
        %1256 = vmax.xlane.f32.xlu0 %v1255
        %v1257 = vpop.xlane.xlu0 %1256
        %v1258 = vsel %vm1254, %v908, -inf
        %1259 = vmax.xlane.f32.xlu0 %v1258
        %v1260 = vpop.xlane.xlu0 %1259
        %v1261 = vsel %vm1254, %v954, -inf
        %1262 = vmax.xlane.f32.xlu0 %v1261
        %v1263 = vpop.xlane.xlu0 %1262
        %v1264 = vsel %vm1254, %v957, -inf
        %1265 = vmax.xlane.f32.xlu0 %v1264
        %v1266 = vpop.xlane.xlu0 %1265
        %v1267 = vsel %vm1254, %v1003, -inf
        %1268 = vmax.xlane.f32.xlu0 %v1267
        %v1269 = vpop.xlane.xlu0 %1268
        %v1270 = vsel %vm1254, %v1006, -inf
        %1271 = vmax.xlane.f32.xlu0 %v1270
        %v1272 = vpop.xlane.xlu0 %1271
        %v1273 = vsel %vm1254, %v1052, -inf
        %1274 = vmax.xlane.f32.xlu0 %v1273
        %v1275 = vpop.xlane.xlu0 %1274
        %v1276 = vsel %vm1254, %v1055, -inf
        %1277 = vmax.xlane.f32.xlu0 %v1276
        %v1278 = vpop.xlane.xlu0 %1277
        %v1279 = vsel %vm1254, %v1101, -inf
        %1280 = vmax.xlane.f32.xlu0 %v1279
        %v1281 = vpop.xlane.xlu0 %1280
        %v1282 = vsel %vm1254, %v1104, -inf
        %1283 = vmax.xlane.f32.xlu0 %v1282
        %v1284 = vpop.xlane.xlu0 %1283
        %v1285 = vsel %vm1254, %v1150, -inf
        %1286 = vmax.xlane.f32.xlu0 %v1285
        %v1287 = vpop.xlane.xlu0 %1286
        %v1288 = vsel %vm1254, %v1153, -inf
        %1289 = vmax.xlane.f32.xlu0 %v1288
        %v1290 = vpop.xlane.xlu0 %1289
        %v1291 = vsel %vm1254, %v1199, -inf
        %1292 = vmax.xlane.f32.xlu0 %v1291
        %v1293 = vpop.xlane.xlu0 %1292
        %v1294 = vsel %vm1254, %v1202, -inf
        %1295 = vmax.xlane.f32.xlu0 %v1294
        %v1296 = vpop.xlane.xlu0 %1295
        %v1297 = vsel %vm1254, %v1248, -inf
        %1298 = vmax.xlane.f32.xlu0 %v1297
        %v1299 = vpop.xlane.xlu0 %1298
        %v1300 = vsel %vm1254, %v1251, -inf
        %1301 = vmax.xlane.f32.xlu0 %v1300
        %v1302 = vpop.xlane.xlu0 %1301
        %v1303 = vsub.f32 %v905, %v1257
        %v1304 = vsub.f32 %v908, %v1260
        %v1305 = vsub.f32 %v954, %v1263
        %v1306 = vsub.f32 %v957, %v1266
        %v1307 = vsub.f32 %v1003, %v1269
        %v1308 = vsub.f32 %v1006, %v1272
        %v1309 = vsub.f32 %v1052, %v1275
        %v1310 = vsub.f32 %v1055, %v1278
        %v1311 = vsub.f32 %v1101, %v1281
        %v1312 = vsub.f32 %v1104, %v1284
        %v1313 = vsub.f32 %v1150, %v1287
        %v1314 = vsub.f32 %v1153, %v1290
        %v1315 = vsub.f32 %v1199, %v1293
        %v1316 = vsub.f32 %v1202, %v1296
        %v1317 = vsub.f32 %v1248, %v1299
        %v1318 = vsub.f32 %v1251, %v1302
        %v1319 = vmul.f32 %v1303, 1.442695
        %v1320 = vpow.pop %v1319
        %v1321 = vmul.f32 %v1304, 1.442695
        %v1322 = vpow.pop %v1321
        %v1323 = vmul.f32 %v1305, 1.442695
        %v1324 = vpow.pop %v1323
        %v1325 = vmul.f32 %v1306, 1.442695
        %v1326 = vpow.pop %v1325
        %v1327 = vmul.f32 %v1307, 1.442695
        %v1328 = vpow.pop %v1327
        %v1329 = vmul.f32 %v1308, 1.442695
        %v1330 = vpow.pop %v1329
        %v1331 = vmul.f32 %v1309, 1.442695
        %v1332 = vpow.pop %v1331
        %v1333 = vmul.f32 %v1310, 1.442695
        %v1334 = vpow.pop %v1333
        %v1335 = vmul.f32 %v1311, 1.442695
        %v1336 = vpow.pop %v1335
        %v1337 = vmul.f32 %v1312, 1.442695
        %v1338 = vpow.pop %v1337
        %v1339 = vmul.f32 %v1313, 1.442695
        %v1340 = vpow.pop %v1339
        %v1341 = vmul.f32 %v1314, 1.442695
        %v1342 = vpow.pop %v1341
        %v1343 = vmul.f32 %v1315, 1.442695
        %v1344 = vpow.pop %v1343
        %v1345 = vmul.f32 %v1316, 1.442695
        %v1346 = vpow.pop %v1345
        %v1347 = vmul.f32 %v1317, 1.442695
        %v1348 = vpow.pop %v1347
        %v1349 = vmul.f32 %v1318, 1.442695
        %v1350 = vpow.pop %v1349
        %v1351 = vsel %vm1254, %v1320, 0.0
        %1352 = vadd.xlane.f32.xlu0 %v1351
        %v1353 = vpop.xlane.xlu0 %1352
        %v1354 = vsel %vm1254, %v1322, 0.0
        %1355 = vadd.xlane.f32.xlu0 %v1354
        %v1356 = vpop.xlane.xlu0 %1355
        %v1357 = vsel %vm1254, %v1324, 0.0
        %1358 = vadd.xlane.f32.xlu0 %v1357
        %v1359 = vpop.xlane.xlu0 %1358
        %v1360 = vsel %vm1254, %v1326, 0.0
        %1361 = vadd.xlane.f32.xlu0 %v1360
        %v1362 = vpop.xlane.xlu0 %1361
        %v1363 = vsel %vm1254, %v1328, 0.0
        %1364 = vadd.xlane.f32.xlu0 %v1363
        %v1365 = vpop.xlane.xlu0 %1364
        %v1366 = vsel %vm1254, %v1330, 0.0
        %1367 = vadd.xlane.f32.xlu0 %v1366
        %v1368 = vpop.xlane.xlu0 %1367
        %v1369 = vsel %vm1254, %v1332, 0.0
        %1370 = vadd.xlane.f32.xlu0 %v1369
        %v1371 = vpop.xlane.xlu0 %1370
        %v1372 = vsel %vm1254, %v1334, 0.0
        %1373 = vadd.xlane.f32.xlu0 %v1372
        %v1374 = vpop.xlane.xlu0 %1373
        %v1375 = vsel %vm1254, %v1336, 0.0
        %1376 = vadd.xlane.f32.xlu0 %v1375
        %v1377 = vpop.xlane.xlu0 %1376
        %v1378 = vsel %vm1254, %v1338, 0.0
        %1379 = vadd.xlane.f32.xlu0 %v1378
        %v1380 = vpop.xlane.xlu0 %1379
        %v1381 = vsel %vm1254, %v1340, 0.0
        %1382 = vadd.xlane.f32.xlu0 %v1381
        %v1383 = vpop.xlane.xlu0 %1382
        %v1384 = vsel %vm1254, %v1342, 0.0
        %1385 = vadd.xlane.f32.xlu0 %v1384
        %v1386 = vpop.xlane.xlu0 %1385
        %v1387 = vsel %vm1254, %v1344, 0.0
        %1388 = vadd.xlane.f32.xlu0 %v1387
        %v1389 = vpop.xlane.xlu0 %1388
        %v1390 = vsel %vm1254, %v1346, 0.0
        %1391 = vadd.xlane.f32.xlu0 %v1390
        %v1392 = vpop.xlane.xlu0 %1391
        %v1393 = vsel %vm1254, %v1348, 0.0
        %1394 = vadd.xlane.f32.xlu0 %v1393
        %v1395 = vpop.xlane.xlu0 %1394
        %v1396 = vsel %vm1254, %v1350, 0.0
        %1397 = vadd.xlane.f32.xlu0 %v1396
        %v1398 = vpop.xlane.xlu0 %1397
        %v1399 = vrcp.pop %v1353
        %v1400 = vrcp.pop %v1356
        %v1401 = vrcp.pop %v1359
        %v1402 = vrcp.pop %v1362
        %v1403 = vrcp.pop %v1365
        %v1404 = vrcp.pop %v1368
        %v1405 = vrcp.pop %v1371
        %v1406 = vrcp.pop %v1374
        %v1407 = vrcp.pop %v1377
        %v1408 = vrcp.pop %v1380
        %v1409 = vrcp.pop %v1383
        %v1410 = vrcp.pop %v1386
        %v1411 = vrcp.pop %v1389
        %v1412 = vrcp.pop %v1392
        %v1413 = vrcp.pop %v1395
        %v1414 = vrcp.pop %v1398
        %v1415 = vmul.f32 %v1320, %v1399
        %v1416 = vmul.f32 %v1322, %v1400
        %v1417 = vmul.f32 %v1324, %v1401
        %v1418 = vmul.f32 %v1326, %v1402
        %v1419 = vmul.f32 %v1328, %v1403
        %v1420 = vmul.f32 %v1330, %v1404
        %v1421 = vmul.f32 %v1332, %v1405
        %v1422 = vmul.f32 %v1334, %v1406
        %v1423 = vmul.f32 %v1336, %v1407
        %v1424 = vmul.f32 %v1338, %v1408
        %v1425 = vmul.f32 %v1340, %v1409
        %v1426 = vmul.f32 %v1342, %v1410
        %v1427 = vmul.f32 %v1344, %v1411
        %v1428 = vmul.f32 %v1346, %v1412
        %v1429 = vmul.f32 %v1348, %v1413
        %v1430 = vmul.f32 %v1350, %v1414
        %v1431 = vpack.c.bf16 %v1416, %v1415
        %v1432 = vpack.c.bf16 %v1418, %v1417
        %v1433 = vpack.c.bf16 %v1420, %v1419
        %v1434 = vpack.c.bf16 %v1422, %v1421
        %v1435 = vpack.c.bf16 %v1424, %v1423
        %v1436 = vpack.c.bf16 %v1426, %v1425
        %v1437 = vpack.c.bf16 %v1428, %v1427
        %v1438 = vpack.c.bf16 %v1430, %v1429
        %1439 = vrot.lane.b32.xlu0 %v843, 64
        %v1440 = vpop.permute.xlu0 %1439
        %v1443 = vsel %vm1254, %v1431, 0
        %1445 = vmatprep.subr.bf16.mxu0 0
        %1446 = vmatpush1.bf16.msra.mxu0 0
        %1447 = vmatprep.subr.bf16.mxu0 0
        %1448 = vmatpush1.bf16.msra.mxu0 0
        %1449 = vmatprep.subr.bf16.mxu0 0
        %1450 = vmatpush1.bf16.msra.mxu0 0
        %1451 = vmatprep.subr.bf16.mxu0 0
        %1452 = vmatpush1.bf16.msra.mxu0 0
        %1453 = vmatprep.subr.bf16.mxu0 0
        %1454 = vmatpush1.bf16.msra.mxu0 0
        %1455 = vmatprep.subr.bf16.mxu0 0
        %1456 = vmatpush1.bf16.msra.mxu0 0
        %1457 = vmatprep.subr.bf16.mxu0 0
        %1458 = vmatpush1.bf16.msra.mxu0 0
        %1459 = vmatprep.subr.bf16.mxu0 0
        %1460 = vmatpush1.bf16.msra.mxu0 %v1440
        %1461 = vmatprep.subr.bf16.mxu0 0
        %1462 = vmatpush2.bf16.msra.mxu0 0
        %1463 = vmatprep.subr.bf16.mxu0 0
        %1464 = vmatpush2.bf16.msra.mxu0 0
        %1465 = vmatprep.subr.bf16.mxu0 0
        %1466 = vmatpush2.bf16.msra.mxu0 0
        %1467 = vmatprep.subr.bf16.mxu0 0
        %1468 = vmatpush2.bf16.msra.mxu0 0
        %1469 = vmatprep.subr.bf16.mxu0 0
        %1470 = vmatpush2.bf16.msra.mxu0 0
        %1471 = vmatprep.subr.bf16.mxu0 0
        %1472 = vmatpush2.bf16.msra.mxu0 0
        %1473 = vmatprep.subr.bf16.mxu0 0
        %1474 = vmatpush2.bf16.msra.mxu0 0
        %1475 = vmatprep.subr.bf16.mxu0 0
        %1476 = vmatpush2.bf16.msra.mxu0 0
        %1477 = vmatprep.mubr.bf16.mxu0 0
        %1478 = vmatmul.mubr.bf16.gmra.mxu0 %v1443
        %v1479 = vpop.f32.mrf.mxu0
        %v1480 = vadd.f32 0.0, %v1479
        %v1481 = vpop.f32.mrf.mxu0
        %v1482 = vpop.f32.mrf.mxu0
        %v1483 = vadd.f32 0.0, %v1482
        %v1484 = vpop.f32.mrf.mxu0
        %1485 = vdwg.mxu0
        %1486 = vrot.lane.b32.xlu0 %v844, 64
        %v1487 = vpop.permute.xlu0 %1486
        %v1490 = vsel %vm1254, %v1432, 0
        %1492 = vmatprep.subr.bf16.mxu0 0
        %1493 = vmatpush1.bf16.msra.mxu0 0
        %1494 = vmatprep.subr.bf16.mxu0 0
        %1495 = vmatpush1.bf16.msra.mxu0 0
        %1496 = vmatprep.subr.bf16.mxu0 0
        %1497 = vmatpush1.bf16.msra.mxu0 0
        %1498 = vmatprep.subr.bf16.mxu0 0
        %1499 = vmatpush1.bf16.msra.mxu0 0
        %1500 = vmatprep.subr.bf16.mxu0 0
        %1501 = vmatpush1.bf16.msra.mxu0 0
        %1502 = vmatprep.subr.bf16.mxu0 0
        %1503 = vmatpush1.bf16.msra.mxu0 0
        %1504 = vmatprep.subr.bf16.mxu0 0
        %1505 = vmatpush1.bf16.msra.mxu0 0
        %1506 = vmatprep.subr.bf16.mxu0 0
        %1507 = vmatpush1.bf16.msra.mxu0 %v1487
        %1508 = vmatprep.subr.bf16.mxu0 0
        %1509 = vmatpush2.bf16.msra.mxu0 0
        %1510 = vmatprep.subr.bf16.mxu0 0
        %1511 = vmatpush2.bf16.msra.mxu0 0
        %1512 = vmatprep.subr.bf16.mxu0 0
        %1513 = vmatpush2.bf16.msra.mxu0 0
        %1514 = vmatprep.subr.bf16.mxu0 0
        %1515 = vmatpush2.bf16.msra.mxu0 0
        %1516 = vmatprep.subr.bf16.mxu0 0
        %1517 = vmatpush2.bf16.msra.mxu0 0
        %1518 = vmatprep.subr.bf16.mxu0 0
        %1519 = vmatpush2.bf16.msra.mxu0 0
        %1520 = vmatprep.subr.bf16.mxu0 0
        %1521 = vmatpush2.bf16.msra.mxu0 0
        %1522 = vmatprep.subr.bf16.mxu0 0
        %1523 = vmatpush2.bf16.msra.mxu0 0
        %1524 = vmatprep.mubr.bf16.mxu0 0
        %1525 = vmatmul.mubr.bf16.gmra.mxu0 %v1490
        %v1526 = vpop.f32.mrf.mxu0
        %v1527 = vadd.f32 0.0, %v1526
        %v1528 = vpop.f32.mrf.mxu0
        %v1529 = vpop.f32.mrf.mxu0
        %v1530 = vadd.f32 0.0, %v1529
        %v1531 = vpop.f32.mrf.mxu0
        %1532 = vdwg.mxu0
        %1533 = vrot.lane.b32.xlu0 %v848, 64
        %v1534 = vpop.permute.xlu0 %1533
        %v1537 = vsel %vm1254, %v1433, 0
        %1539 = vmatprep.subr.bf16.mxu0 0
        %1540 = vmatpush1.bf16.msra.mxu0 0
        %1541 = vmatprep.subr.bf16.mxu0 0
        %1542 = vmatpush1.bf16.msra.mxu0 0
        %1543 = vmatprep.subr.bf16.mxu0 0
        %1544 = vmatpush1.bf16.msra.mxu0 0
        %1545 = vmatprep.subr.bf16.mxu0 0
        %1546 = vmatpush1.bf16.msra.mxu0 0
        %1547 = vmatprep.subr.bf16.mxu0 0
        %1548 = vmatpush1.bf16.msra.mxu0 0
        %1549 = vmatprep.subr.bf16.mxu0 0
        %1550 = vmatpush1.bf16.msra.mxu0 0
        %1551 = vmatprep.subr.bf16.mxu0 0
        %1552 = vmatpush1.bf16.msra.mxu0 0
        %1553 = vmatprep.subr.bf16.mxu0 0
        %1554 = vmatpush1.bf16.msra.mxu0 %v1534
        %1555 = vmatprep.subr.bf16.mxu0 0
        %1556 = vmatpush2.bf16.msra.mxu0 0
        %1557 = vmatprep.subr.bf16.mxu0 0
        %1558 = vmatpush2.bf16.msra.mxu0 0
        %1559 = vmatprep.subr.bf16.mxu0 0
        %1560 = vmatpush2.bf16.msra.mxu0 0
        %1561 = vmatprep.subr.bf16.mxu0 0
        %1562 = vmatpush2.bf16.msra.mxu0 0
        %1563 = vmatprep.subr.bf16.mxu0 0
        %1564 = vmatpush2.bf16.msra.mxu0 0
        %1565 = vmatprep.subr.bf16.mxu0 0
        %1566 = vmatpush2.bf16.msra.mxu0 0
        %1567 = vmatprep.subr.bf16.mxu0 0
        %1568 = vmatpush2.bf16.msra.mxu0 0
        %1569 = vmatprep.subr.bf16.mxu0 0
        %1570 = vmatpush2.bf16.msra.mxu0 0
        %1571 = vmatprep.mubr.bf16.mxu0 0
        %1572 = vmatmul.mubr.bf16.gmra.mxu0 %v1537
        %v1573 = vpop.f32.mrf.mxu0
        %v1574 = vadd.f32 0.0, %v1573
        %v1575 = vpop.f32.mrf.mxu0
        %v1576 = vpop.f32.mrf.mxu0
        %v1577 = vadd.f32 0.0, %v1576
        %v1578 = vpop.f32.mrf.mxu0
        %1579 = vdwg.mxu0
        %1580 = vrot.lane.b32.xlu0 %v850, 64
        %v1581 = vpop.permute.xlu0 %1580
        %v1584 = vsel %vm1254, %v1434, 0
        %1586 = vmatprep.subr.bf16.mxu0 0
        %1587 = vmatpush1.bf16.msra.mxu0 0
        %1588 = vmatprep.subr.bf16.mxu0 0
        %1589 = vmatpush1.bf16.msra.mxu0 0
        %1590 = vmatprep.subr.bf16.mxu0 0
        %1591 = vmatpush1.bf16.msra.mxu0 0
        %1592 = vmatprep.subr.bf16.mxu0 0
        %1593 = vmatpush1.bf16.msra.mxu0 0
        %1594 = vmatprep.subr.bf16.mxu0 0
        %1595 = vmatpush1.bf16.msra.mxu0 0
        %1596 = vmatprep.subr.bf16.mxu0 0
        %1597 = vmatpush1.bf16.msra.mxu0 0
        %1598 = vmatprep.subr.bf16.mxu0 0
        %1599 = vmatpush1.bf16.msra.mxu0 0
        %1600 = vmatprep.subr.bf16.mxu0 0
        %1601 = vmatpush1.bf16.msra.mxu0 %v1581
        %1602 = vmatprep.subr.bf16.mxu0 0
        %1603 = vmatpush2.bf16.msra.mxu0 0
        %1604 = vmatprep.subr.bf16.mxu0 0
        %1605 = vmatpush2.bf16.msra.mxu0 0
        %1606 = vmatprep.subr.bf16.mxu0 0
        %1607 = vmatpush2.bf16.msra.mxu0 0
        %1608 = vmatprep.subr.bf16.mxu0 0
        %1609 = vmatpush2.bf16.msra.mxu0 0
        %1610 = vmatprep.subr.bf16.mxu0 0
        %1611 = vmatpush2.bf16.msra.mxu0 0
        %1612 = vmatprep.subr.bf16.mxu0 0
        %1613 = vmatpush2.bf16.msra.mxu0 0
        %1614 = vmatprep.subr.bf16.mxu0 0
        %1615 = vmatpush2.bf16.msra.mxu0 0
        %1616 = vmatprep.subr.bf16.mxu0 0
        %1617 = vmatpush2.bf16.msra.mxu0 0
        %1618 = vmatprep.mubr.bf16.mxu0 0
        %1619 = vmatmul.mubr.bf16.gmra.mxu0 %v1584
        %v1620 = vpop.f32.mrf.mxu0
        %v1621 = vadd.f32 0.0, %v1620
        %v1622 = vpop.f32.mrf.mxu0
        %v1623 = vpop.f32.mrf.mxu0
        %v1624 = vadd.f32 0.0, %v1623
        %v1625 = vpop.f32.mrf.mxu0
        %1626 = vdwg.mxu0
        %1627 = vrot.lane.b32.xlu0 %v852, 64
        %v1628 = vpop.permute.xlu0 %1627
        %v1631 = vsel %vm1254, %v1435, 0
        %1633 = vmatprep.subr.bf16.mxu0 0
        %1634 = vmatpush1.bf16.msra.mxu0 0
        %1635 = vmatprep.subr.bf16.mxu0 0
        %1636 = vmatpush1.bf16.msra.mxu0 0
        %1637 = vmatprep.subr.bf16.mxu0 0
        %1638 = vmatpush1.bf16.msra.mxu0 0
        %1639 = vmatprep.subr.bf16.mxu0 0
        %1640 = vmatpush1.bf16.msra.mxu0 0
        %1641 = vmatprep.subr.bf16.mxu0 0
        %1642 = vmatpush1.bf16.msra.mxu0 0
        %1643 = vmatprep.subr.bf16.mxu0 0
        %1644 = vmatpush1.bf16.msra.mxu0 0
        %1645 = vmatprep.subr.bf16.mxu0 0
        %1646 = vmatpush1.bf16.msra.mxu0 0
        %1647 = vmatprep.subr.bf16.mxu0 0
        %1648 = vmatpush1.bf16.msra.mxu0 %v1628
        %1649 = vmatprep.subr.bf16.mxu0 0
        %1650 = vmatpush2.bf16.msra.mxu0 0
        %1651 = vmatprep.subr.bf16.mxu0 0
        %1652 = vmatpush2.bf16.msra.mxu0 0
        %1653 = vmatprep.subr.bf16.mxu0 0
        %1654 = vmatpush2.bf16.msra.mxu0 0
        %1655 = vmatprep.subr.bf16.mxu0 0
        %1656 = vmatpush2.bf16.msra.mxu0 0
        %1657 = vmatprep.subr.bf16.mxu0 0
        %1658 = vmatpush2.bf16.msra.mxu0 0
        %1659 = vmatprep.subr.bf16.mxu0 0
        %1660 = vmatpush2.bf16.msra.mxu0 0
        %1661 = vmatprep.subr.bf16.mxu0 0
        %1662 = vmatpush2.bf16.msra.mxu0 0
        %1663 = vmatprep.subr.bf16.mxu0 0
        %1664 = vmatpush2.bf16.msra.mxu0 0
        %1665 = vmatprep.mubr.bf16.mxu0 0
        %1666 = vmatmul.mubr.bf16.gmra.mxu0 %v1631
        %v1667 = vpop.f32.mrf.mxu0
        %v1668 = vadd.f32 0.0, %v1667
        %v1669 = vpop.f32.mrf.mxu0
        %v1670 = vpop.f32.mrf.mxu0
        %v1671 = vadd.f32 0.0, %v1670
        %v1672 = vpop.f32.mrf.mxu0
        %1673 = vdwg.mxu0
        %1674 = vrot.lane.b32.xlu0 %v854, 64
        %v1675 = vpop.permute.xlu0 %1674
        %v1678 = vsel %vm1254, %v1436, 0
        %1680 = vmatprep.subr.bf16.mxu0 0
        %1681 = vmatpush1.bf16.msra.mxu0 0
        %1682 = vmatprep.subr.bf16.mxu0 0
        %1683 = vmatpush1.bf16.msra.mxu0 0
        %1684 = vmatprep.subr.bf16.mxu0 0
        %1685 = vmatpush1.bf16.msra.mxu0 0
        %1686 = vmatprep.subr.bf16.mxu0 0
        %1687 = vmatpush1.bf16.msra.mxu0 0
        %1688 = vmatprep.subr.bf16.mxu0 0
        %1689 = vmatpush1.bf16.msra.mxu0 0
        %1690 = vmatprep.subr.bf16.mxu0 0
        %1691 = vmatpush1.bf16.msra.mxu0 0
        %1692 = vmatprep.subr.bf16.mxu0 0
        %1693 = vmatpush1.bf16.msra.mxu0 0
        %1694 = vmatprep.subr.bf16.mxu0 0
        %1695 = vmatpush1.bf16.msra.mxu0 %v1675
        %1696 = vmatprep.subr.bf16.mxu0 0
        %1697 = vmatpush2.bf16.msra.mxu0 0
        %1698 = vmatprep.subr.bf16.mxu0 0
        %1699 = vmatpush2.bf16.msra.mxu0 0
        %1700 = vmatprep.subr.bf16.mxu0 0
        %1701 = vmatpush2.bf16.msra.mxu0 0
        %1702 = vmatprep.subr.bf16.mxu0 0
        %1703 = vmatpush2.bf16.msra.mxu0 0
        %1704 = vmatprep.subr.bf16.mxu0 0
        %1705 = vmatpush2.bf16.msra.mxu0 0
        %1706 = vmatprep.subr.bf16.mxu0 0
        %1707 = vmatpush2.bf16.msra.mxu0 0
        %1708 = vmatprep.subr.bf16.mxu0 0
        %1709 = vmatpush2.bf16.msra.mxu0 0
        %1710 = vmatprep.subr.bf16.mxu0 0
        %1711 = vmatpush2.bf16.msra.mxu0 0
        %1712 = vmatprep.mubr.bf16.mxu0 0
        %1713 = vmatmul.mubr.bf16.gmra.mxu0 %v1678
        %v1714 = vpop.f32.mrf.mxu0
        %v1715 = vadd.f32 0.0, %v1714
        %v1716 = vpop.f32.mrf.mxu0
        %v1717 = vpop.f32.mrf.mxu0
        %v1718 = vadd.f32 0.0, %v1717
        %v1719 = vpop.f32.mrf.mxu0
        %1720 = vdwg.mxu0
        %1721 = vrot.lane.b32.xlu0 %v856, 64
        %v1722 = vpop.permute.xlu0 %1721
        %v1725 = vsel %vm1254, %v1437, 0
        %1727 = vmatprep.subr.bf16.mxu0 0
        %1728 = vmatpush1.bf16.msra.mxu0 0
        %1729 = vmatprep.subr.bf16.mxu0 0
        %1730 = vmatpush1.bf16.msra.mxu0 0
        %1731 = vmatprep.subr.bf16.mxu0 0
        %1732 = vmatpush1.bf16.msra.mxu0 0
        %1733 = vmatprep.subr.bf16.mxu0 0
        %1734 = vmatpush1.bf16.msra.mxu0 0
        %1735 = vmatprep.subr.bf16.mxu0 0
        %1736 = vmatpush1.bf16.msra.mxu0 0
        %1737 = vmatprep.subr.bf16.mxu0 0
        %1738 = vmatpush1.bf16.msra.mxu0 0
        %1739 = vmatprep.subr.bf16.mxu0 0
        %1740 = vmatpush1.bf16.msra.mxu0 0
        %1741 = vmatprep.subr.bf16.mxu0 0
        %1742 = vmatpush1.bf16.msra.mxu0 %v1722
        %1743 = vmatprep.subr.bf16.mxu0 0
        %1744 = vmatpush2.bf16.msra.mxu0 0
        %1745 = vmatprep.subr.bf16.mxu0 0
        %1746 = vmatpush2.bf16.msra.mxu0 0
        %1747 = vmatprep.subr.bf16.mxu0 0
        %1748 = vmatpush2.bf16.msra.mxu0 0
        %1749 = vmatprep.subr.bf16.mxu0 0
        %1750 = vmatpush2.bf16.msra.mxu0 0
        %1751 = vmatprep.subr.bf16.mxu0 0
        %1752 = vmatpush2.bf16.msra.mxu0 0
        %1753 = vmatprep.subr.bf16.mxu0 0
        %1754 = vmatpush2.bf16.msra.mxu0 0
        %1755 = vmatprep.subr.bf16.mxu0 0
        %1756 = vmatpush2.bf16.msra.mxu0 0
        %1757 = vmatprep.subr.bf16.mxu0 0
        %1758 = vmatpush2.bf16.msra.mxu0 0
        %1759 = vmatprep.mubr.bf16.mxu0 0
        %1760 = vmatmul.mubr.bf16.gmra.mxu0 %v1725
        %v1761 = vpop.f32.mrf.mxu0
        %v1762 = vadd.f32 0.0, %v1761
        %v1763 = vpop.f32.mrf.mxu0
        %v1764 = vpop.f32.mrf.mxu0
        %v1765 = vadd.f32 0.0, %v1764
        %v1766 = vpop.f32.mrf.mxu0
        %1767 = vdwg.mxu0
        %1768 = vrot.lane.b32.xlu0 %v858, 64
        %v1769 = vpop.permute.xlu0 %1768
        %v1772 = vsel %vm1254, %v1438, 0
        %1774 = vmatprep.subr.bf16.mxu0 0
        %1775 = vmatpush1.bf16.msra.mxu0 0
        %1776 = vmatprep.subr.bf16.mxu0 0
        %1777 = vmatpush1.bf16.msra.mxu0 0
        %1778 = vmatprep.subr.bf16.mxu0 0
        %1779 = vmatpush1.bf16.msra.mxu0 0
        %1780 = vmatprep.subr.bf16.mxu0 0
        %1781 = vmatpush1.bf16.msra.mxu0 0
        %1782 = vmatprep.subr.bf16.mxu0 0
        %1783 = vmatpush1.bf16.msra.mxu0 0
        %1784 = vmatprep.subr.bf16.mxu0 0
        %1785 = vmatpush1.bf16.msra.mxu0 0
        %1786 = vmatprep.subr.bf16.mxu0 0
        %1787 = vmatpush1.bf16.msra.mxu0 0
        %1788 = vmatprep.subr.bf16.mxu0 0
        %1789 = vmatpush1.bf16.msra.mxu0 %v1769
        %1790 = vmatprep.subr.bf16.mxu0 0
        %1791 = vmatpush2.bf16.msra.mxu0 0
        %1792 = vmatprep.subr.bf16.mxu0 0
        %1793 = vmatpush2.bf16.msra.mxu0 0
        %1794 = vmatprep.subr.bf16.mxu0 0
        %1795 = vmatpush2.bf16.msra.mxu0 0
        %1796 = vmatprep.subr.bf16.mxu0 0
        %1797 = vmatpush2.bf16.msra.mxu0 0
        %1798 = vmatprep.subr.bf16.mxu0 0
        %1799 = vmatpush2.bf16.msra.mxu0 0
        %1800 = vmatprep.subr.bf16.mxu0 0
        %1801 = vmatpush2.bf16.msra.mxu0 0
        %1802 = vmatprep.subr.bf16.mxu0 0
        %1803 = vmatpush2.bf16.msra.mxu0 0
        %1804 = vmatprep.subr.bf16.mxu0 0
        %1805 = vmatpush2.bf16.msra.mxu0 0
        %1806 = vmatprep.mubr.bf16.mxu0 0
        %1807 = vmatmul.mubr.bf16.gmra.mxu0 %v1772
        %v1808 = vpop.f32.mrf.mxu0
        %v1809 = vadd.f32 0.0, %v1808
        %v1810 = vpop.f32.mrf.mxu0
        %v1811 = vpop.f32.mrf.mxu0
        %v1812 = vadd.f32 0.0, %v1811
        %v1813 = vpop.f32.mrf.mxu0
        %1814 = vdwg.mxu0
        %v1815 = vpack.c.bf16 %v1483, %v1480
        %v1816 = vpack.c.bf16 %v1530, %v1527
        %v1817 = vpack.c.bf16 %v1577, %v1574
        %v1818 = vpack.c.bf16 %v1624, %v1621
        %v1819 = vpack.c.bf16 %v1671, %v1668
        %v1820 = vpack.c.bf16 %v1718, %v1715
        %v1821 = vpack.c.bf16 %v1765, %v1762
        %v1822 = vpack.c.bf16 %v1812, %v1809
        %1825 = vrot.lane.b32.xlu0 %v1817, 8
        %v1826 = vpop.permute.xlu0 %1825
        %1827 = vrot.lane.b32.xlu0 %v1818, 8
        %v1828 = vpop.permute.xlu0 %1827
        %1831 = vrot.lane.b32.xlu0 %v1819, 16
        %v1832 = vpop.permute.xlu0 %1831
        %1833 = vrot.lane.b32.xlu0 %v1820, 16
        %v1834 = vpop.permute.xlu0 %1833
        %1837 = vrot.lane.b32.xlu0 %v1821, 24
        %v1838 = vpop.permute.xlu0 %1837
        %1839 = vrot.lane.b32.xlu0 %v1822, 24
        %v1840 = vpop.permute.xlu0 %1839
        %v1843 = vsel %vm863, %v1815, %v1826
        %v1846 = vsel %vm863, %v1816, %v1828
        %v1848 = vsel %vm1254, %v1843, %v1832
        %v1850 = vsel %vm1254, %v1846, %v1834
        %vm1851 = vcmask 195584
        %v1853 = vsel %vm1851, %v1848, %v1838
        %v1855 = vsel %vm1851, %v1850, %v1840
        %v1856 = vld [vmem:[%s642] sm:$0xf]
        %v1857 = vld [vmem:[%s642 + $0x4] sm:$0xf]
        %v1858 = vld [vmem:[%s642 + $0x8] sm:$0xf]
        %v1859 = vld [vmem:[%s642 + $0xc] sm:$0xf]
        %v1860 = vld [vmem:[%s645] sm:$0x1]
        %v1862 = vlaneseq
        %v1863 = vshrl.u32 %v1862, 7
        %v1864 = vsub.s32 0, %v1863
        %v1865 = vrot.slane %v1860, %v1864
        %v1871 = vunpack.c.l.b16 %v1856
        %v1872 = vunpack.c.l.b16 %v1857
        %v1873 = vunpack.c.l.b16 %v1858
        %v1874 = vunpack.c.l.b16 %v1859
        %v1875 = vpack.c.b16 %v1872, %v1871
        %v1876 = vpack.c.b16 %v1874, %v1873
        %v1879 = vsel %vm689, %v1853, 0
        %v1881 = vsel %vm689, %v1855, 0
        %1883 = vmatprep.subr.bf16.mxu0 0
        %1884 = vmatpush1.bf16.msra.mxu0 0
        %1885 = vmatprep.subr.bf16.mxu0 0
        %1886 = vmatpush1.bf16.msra.mxu0 0
        %1887 = vmatprep.subr.bf16.mxu0 0
        %1888 = vmatpush1.bf16.msra.mxu0 0
        %1889 = vmatprep.subr.bf16.mxu0 0
        %1890 = vmatpush1.bf16.msra.mxu0 0
        %1891 = vmatprep.subr.bf16.mxu0 0
        %1892 = vmatpush1.bf16.msra.mxu0 0
        %1893 = vmatprep.subr.bf16.mxu0 0
        %1894 = vmatpush1.bf16.msra.mxu0 0
        %1895 = vmatprep.subr.bf16.mxu0 0
        %1896 = vmatpush1.bf16.msra.mxu0 %v1876
        %1897 = vmatprep.subr.bf16.mxu0 0
        %1898 = vmatpush1.bf16.msra.mxu0 %v1875
        %1899 = vmatprep.subr.bf16.mxu0 0
        %1900 = vmatpush2.bf16.msra.mxu0 0
        %1901 = vmatprep.subr.bf16.mxu0 0
        %1902 = vmatpush2.bf16.msra.mxu0 0
        %1903 = vmatprep.subr.bf16.mxu0 0
        %1904 = vmatpush2.bf16.msra.mxu0 0
        %1905 = vmatprep.subr.bf16.mxu0 0
        %1906 = vmatpush2.bf16.msra.mxu0 0
        %1907 = vmatprep.subr.bf16.mxu0 0
        %1908 = vmatpush2.bf16.msra.mxu0 0
        %1909 = vmatprep.subr.bf16.mxu0 0
        %1910 = vmatpush2.bf16.msra.mxu0 0
        %1911 = vmatprep.subr.bf16.mxu0 0
        %1912 = vmatpush2.bf16.msra.mxu0 0
        %1913 = vmatprep.subr.bf16.mxu0 0
        %1914 = vmatpush2.bf16.msra.mxu0 0
        %1915 = vmatprep.mubr.bf16.mxu0 0
        %1916 = vmatmul.mubr.bf16.gmra.mxu0 %v1879
        %v1917 = vpop.f32.mrf.mxu0
        %v1918 = vadd.f32 %v1865, %v1917
        %v1919 = vpop.f32.mrf.mxu0
        %v1920 = vpop.f32.mrf.mxu0
        %v1921 = vadd.f32 %v1865, %v1920
        %v1922 = vpop.f32.mrf.mxu0
        %1923 = vmatprep.mubr.bf16.mxu0 0
        %1924 = vmatmul.mubr.bf16.gmra.mxu0 %v1881
        %v1925 = vpop.f32.mrf.mxu0
        %v1926 = vadd.f32 %v1865, %v1925
        %v1927 = vpop.f32.mrf.mxu0
        %v1928 = vpop.f32.mrf.mxu0
        %v1929 = vadd.f32 %v1865, %v1928
        %v1930 = vpop.f32.mrf.mxu0
        %1931 = vdwg.mxu0
        %v1932 = vadd.f32 %v683, %v1918
        %v1933 = vadd.f32 %v684, %v1921
        %v1934 = vadd.f32 %v685, %v1926
        %v1935 = vadd.f32 %v686, %v1929
        %1936 = vst.msk [vmem:[#allocation2] sm:$0xff] %vm689, %v1932
        %1937 = vst.msk [vmem:[#allocation2 + $0x8] sm:$0xff] %vm689, %v1933
        %1938 = vst.msk [vmem:[#allocation2 + $0x10] sm:$0xff] %vm689, %v1934
        %1939 = vst.msk [vmem:[#allocation2 + $0x18] sm:$0xff] %vm689, %v1935
        %v1940 = vld [vmem:[#allocation2] sm:$0xff]
        %v1941 = vld [vmem:[#allocation2 + $0x8] sm:$0xff]
        %v1942 = vld [vmem:[#allocation2 + $0x10] sm:$0xff]
        %v1943 = vld [vmem:[#allocation2 + $0x18] sm:$0xff]
        %v1944 = vld [vmem:[%s648] sm:$0x1]
        %v1945 = vld [vmem:[%s651] sm:$0x1]
        %v1946 = vsel %vm689, %v1940, 0.0
        %1947 = vadd.xlane.f32.xlu0 %v1946
        %v1948 = vpop.xlane.xlu0 %1947
        %v1949 = vsel %vm689, %v1941, 0.0
        %1950 = vadd.xlane.f32.xlu0 %v1949
        %v1951 = vpop.xlane.xlu0 %1950
        %v1952 = vsel %vm689, %v1942, 0.0
        %1953 = vadd.xlane.f32.xlu0 %v1952
        %v1954 = vpop.xlane.xlu0 %1953
        %v1955 = vsel %vm689, %v1943, 0.0
        %1956 = vadd.xlane.f32.xlu0 %v1955
        %v1957 = vpop.xlane.xlu0 %1956
        %v1958 = vmul.f32 %v1948, %v702
        %v1959 = vmul.f32 %v1951, %v702
        %v1960 = vmul.f32 %v1954, %v702
        %v1961 = vmul.f32 %v1957, %v702
        %v1962 = vsub.f32 %v1940, %v1958
        %v1963 = vsub.f32 %v1941, %v1959
        %v1964 = vsub.f32 %v1942, %v1960
        %v1965 = vsub.f32 %v1943, %v1961
        %v1966 = vmul.f32 %v1962, %v1962
        %v1967 = vmul.f32 %v1963, %v1963
        %v1968 = vmul.f32 %v1964, %v1964
        %v1969 = vmul.f32 %v1965, %v1965
        %v1970 = vsel %vm689, %v1966, 0.0
        %1971 = vadd.xlane.f32.xlu0 %v1970
        %v1972 = vpop.xlane.xlu0 %1971
        %v1973 = vsel %vm689, %v1967, 0.0
        %1974 = vadd.xlane.f32.xlu0 %v1973
        %v1975 = vpop.xlane.xlu0 %1974
        %v1976 = vsel %vm689, %v1968, 0.0
        %1977 = vadd.xlane.f32.xlu0 %v1976
        %v1978 = vpop.xlane.xlu0 %1977
        %v1979 = vsel %vm689, %v1969, 0.0
        %1980 = vadd.xlane.f32.xlu0 %v1979
        %v1981 = vpop.xlane.xlu0 %1980
        %v1982 = vmul.f32 %v1972, %v702
        %v1983 = vmul.f32 %v1975, %v702
        %v1984 = vmul.f32 %v1978, %v702
        %v1985 = vmul.f32 %v1981, %v702
        %v1986 = vadd.f32 %v1982, 1e-05
        %v1987 = vadd.f32 %v1983, 1e-05
        %v1988 = vadd.f32 %v1984, 1e-05
        %v1989 = vadd.f32 %v1985, 1e-05
        %v1990 = vrsqrt.pop %v1986
        %v1991 = vrsqrt.pop %v1987
        %v1992 = vrsqrt.pop %v1988
        %v1993 = vrsqrt.pop %v1989
        %v1994 = vmul.f32 %v1962, %v1990
        %v1995 = vmul.f32 %v1963, %v1991
        %v1996 = vmul.f32 %v1964, %v1992
        %v1997 = vmul.f32 %v1965, %v1993
        %v1999 = vlaneseq
        %v2000 = vshrl.u32 %v1999, 7
        %v2001 = vsub.s32 0, %v2000
        %v2002 = vrot.slane %v1944, %v2001
        %v2004 = vmul.f32 %v1994, %v2002
        %v2005 = vmul.f32 %v1995, %v2002
        %v2006 = vmul.f32 %v1996, %v2002
        %v2007 = vmul.f32 %v1997, %v2002
        %v2009 = vlaneseq
        %v2010 = vshrl.u32 %v2009, 7
        %v2011 = vsub.s32 0, %v2010
        %v2012 = vrot.slane %v1945, %v2011
        %v2014 = vadd.f32 %v2004, %v2012
        %v2015 = vadd.f32 %v2005, %v2012
        %v2016 = vadd.f32 %v2006, %v2012
        %v2017 = vadd.f32 %v2007, %v2012
        %v2018 = vpack.c.bf16 %v2015, %v2014
        %v2019 = vpack.c.bf16 %v2017, %v2016
        %v2020 = vld [vmem:[%s656] sm:$0xf]
        %v2021 = vld [vmem:[%s656 + $0x4] sm:$0xf]
        %v2022 = vld [vmem:[%s656 + $0x8] sm:$0xf]
        %v2023 = vld [vmem:[%s656 + $0xc] sm:$0xf]
        %v2024 = vld [vmem:[%s659] sm:$0x1]
        %v2026 = vlaneseq
        %v2027 = vshrl.u32 %v2026, 7
        %v2028 = vsub.s32 0, %v2027
        %v2029 = vrot.slane %v2024, %v2028
        %v2035 = vunpack.c.l.b16 %v2020
        %v2036 = vunpack.c.l.b16 %v2021
        %v2037 = vunpack.c.l.b16 %v2022
        %v2038 = vunpack.c.l.b16 %v2023
        %v2039 = vpack.c.b16 %v2036, %v2035
        %v2040 = vpack.c.b16 %v2038, %v2037
        %v2044 = vsel %vm689, %v2018, 0
        %v2047 = vsel %vm689, %v2019, 0
        %2049 = vmatprep.subr.bf16.mxu0 0
        %2050 = vmatpush1.bf16.msra.mxu0 0
        %2051 = vmatprep.subr.bf16.mxu0 0
        %2052 = vmatpush1.bf16.msra.mxu0 0
        %2053 = vmatprep.subr.bf16.mxu0 0
        %2054 = vmatpush1.bf16.msra.mxu0 0
        %2055 = vmatprep.subr.bf16.mxu0 0
        %2056 = vmatpush1.bf16.msra.mxu0 0
        %2057 = vmatprep.subr.bf16.mxu0 0
        %2058 = vmatpush1.bf16.msra.mxu0 0
        %2059 = vmatprep.subr.bf16.mxu0 0
        %2060 = vmatpush1.bf16.msra.mxu0 0
        %2061 = vmatprep.subr.bf16.mxu0 0
        %2062 = vmatpush1.bf16.msra.mxu0 %v2040
        %2063 = vmatprep.subr.bf16.mxu0 0
        %2064 = vmatpush1.bf16.msra.mxu0 %v2039
        %2065 = vmatprep.subr.bf16.mxu0 0
        %2066 = vmatpush2.bf16.msra.mxu0 0
        %2067 = vmatprep.subr.bf16.mxu0 0
        %2068 = vmatpush2.bf16.msra.mxu0 0
        %2069 = vmatprep.subr.bf16.mxu0 0
        %2070 = vmatpush2.bf16.msra.mxu0 0
        %2071 = vmatprep.subr.bf16.mxu0 0
        %2072 = vmatpush2.bf16.msra.mxu0 0
        %2073 = vmatprep.subr.bf16.mxu0 0
        %2074 = vmatpush2.bf16.msra.mxu0 0
        %2075 = vmatprep.subr.bf16.mxu0 0
        %2076 = vmatpush2.bf16.msra.mxu0 0
        %2077 = vmatprep.subr.bf16.mxu0 0
        %2078 = vmatpush2.bf16.msra.mxu0 0
        %2079 = vmatprep.subr.bf16.mxu0 0
        %2080 = vmatpush2.bf16.msra.mxu0 0
        %2081 = vmatprep.mubr.bf16.mxu0 0
        %2082 = vmatmul.mubr.bf16.gmra.mxu0 %v2044
        %v2083 = vpop.f32.mrf.mxu0
        %v2084 = vadd.f32 %v2029, %v2083
        %v2085 = vpop.f32.mrf.mxu0
        %v2086 = vpop.f32.mrf.mxu0
        %v2087 = vadd.f32 %v2029, %v2086
        %v2088 = vpop.f32.mrf.mxu0
        %2089 = vmatprep.mubr.bf16.mxu0 0
        %2090 = vmatmul.mubr.bf16.gmra.mxu0 %v2047
        %v2091 = vpop.f32.mrf.mxu0
        %v2092 = vadd.f32 %v2029, %v2091
        %v2093 = vpop.f32.mrf.mxu0
        %v2094 = vpop.f32.mrf.mxu0
        %v2095 = vadd.f32 %v2029, %v2094
        %v2096 = vpop.f32.mrf.mxu0
        %2097 = vdwg.mxu0
        %v2098 = vmul.f32 %v2084, 1.702
        %v2099 = vmul.f32 %v2087, 1.702
        %v2100 = vmul.f32 %v2092, 1.702
        %v2101 = vmul.f32 %v2095, 1.702
        %v2102 = vxor.u32 %v2098, 2147483648
        %v2103 = vxor.u32 %v2099, 2147483648
        %v2104 = vxor.u32 %v2100, 2147483648
        %v2105 = vxor.u32 %v2101, 2147483648
        %v2106 = vmul.f32 %v2102, 1.442695
        %v2107 = vpow.pop %v2106
        %v2108 = vmul.f32 %v2103, 1.442695
        %v2109 = vpow.pop %v2108
        %v2110 = vmul.f32 %v2104, 1.442695
        %v2111 = vpow.pop %v2110
        %v2112 = vmul.f32 %v2105, 1.442695
        %v2113 = vpow.pop %v2112
        %v2114 = vadd.f32 %v2107, 1.0
        %v2115 = vadd.f32 %v2109, 1.0
        %v2116 = vadd.f32 %v2111, 1.0
        %v2117 = vadd.f32 %v2113, 1.0
        %v2118 = vrcp.pop %v2114
        %v2119 = vmul.f32 1.0, %v2118
        %v2120 = vrcp.pop %v2115
        %v2121 = vmul.f32 1.0, %v2120
        %v2122 = vrcp.pop %v2116
        %v2123 = vmul.f32 1.0, %v2122
        %v2124 = vrcp.pop %v2117
        %v2125 = vmul.f32 1.0, %v2124
        %v2126 = vmul.f32 %v2084, %v2119
        %v2127 = vmul.f32 %v2087, %v2121
        %v2128 = vmul.f32 %v2092, %v2123
        %v2129 = vmul.f32 %v2095, %v2125
        %v2130 = vpack.c.bf16 %v2127, %v2126
        %v2131 = vpack.c.bf16 %v2129, %v2128
        %v2132 = vld [vmem:[%s664] sm:$0xf]
        %v2133 = vld [vmem:[%s664 + $0x4] sm:$0xf]
        %v2134 = vld [vmem:[%s664 + $0x8] sm:$0xf]
        %v2135 = vld [vmem:[%s664 + $0xc] sm:$0xf]
        %v2136 = vld [vmem:[%s664 + $0x10] sm:$0xf]
        %v2137 = vld [vmem:[%s664 + $0x14] sm:$0xf]
        %v2138 = vld [vmem:[%s664 + $0x18] sm:$0xf]
        %v2139 = vld [vmem:[%s664 + $0x1c] sm:$0xf]
        %v2140 = vld [vmem:[%s664 + $0x20] sm:$0xf]
        %v2141 = vld [vmem:[%s664 + $0x24] sm:$0xf]
        %v2142 = vld [vmem:[%s664 + $0x28] sm:$0xf]
        %v2143 = vld [vmem:[%s664 + $0x2c] sm:$0xf]
        %v2144 = vld [vmem:[%s664 + $0x30] sm:$0xf]
        %v2145 = vld [vmem:[%s664 + $0x34] sm:$0xf]
        %v2146 = vld [vmem:[%s664 + $0x38] sm:$0xf]
        %v2147 = vld [vmem:[%s664 + $0x3c] sm:$0xf]
        %v2148 = vld [vmem:[%s667] sm:$0x1]
        %v2150 = vlaneseq
        %v2151 = vshrl.u32 %v2150, 7
        %v2152 = vsub.s32 0, %v2151
        %v2153 = vrot.slane %v2148, %v2152
        %v2171 = vunpack.c.l.b16 %v2132
        %v2172 = vunpack.c.l.b16 %v2133
        %v2173 = vunpack.c.l.b16 %v2134
        %v2174 = vunpack.c.l.b16 %v2135
        %v2175 = vunpack.c.l.b16 %v2136
        %v2176 = vunpack.c.l.b16 %v2137
        %v2177 = vunpack.c.l.b16 %v2138
        %v2178 = vunpack.c.l.b16 %v2139
        %v2179 = vunpack.c.l.b16 %v2140
        %v2180 = vunpack.c.l.b16 %v2141
        %v2181 = vunpack.c.l.b16 %v2142
        %v2182 = vunpack.c.l.b16 %v2143
        %v2183 = vunpack.c.l.b16 %v2144
        %v2184 = vunpack.c.l.b16 %v2145
        %v2185 = vunpack.c.l.b16 %v2146
        %v2186 = vunpack.c.l.b16 %v2147
        %v2187 = vpack.c.b16 %v2172, %v2171
        %v2188 = vpack.c.b16 %v2174, %v2173
        %v2189 = vpack.c.b16 %v2176, %v2175
        %v2190 = vpack.c.b16 %v2178, %v2177
        %v2191 = vpack.c.b16 %v2180, %v2179
        %v2192 = vpack.c.b16 %v2182, %v2181
        %v2193 = vpack.c.b16 %v2184, %v2183
        %v2194 = vpack.c.b16 %v2186, %v2185
        %2203 = vmatprep.subr.bf16.mxu0 0
        %2204 = vmatpush1.bf16.msra.mxu0 %v2194
        %2205 = vmatprep.subr.bf16.mxu0 0
        %2206 = vmatpush1.bf16.msra.mxu0 %v2193
        %2207 = vmatprep.subr.bf16.mxu0 0
        %2208 = vmatpush1.bf16.msra.mxu0 %v2192
        %2209 = vmatprep.subr.bf16.mxu0 0
        %2210 = vmatpush1.bf16.msra.mxu0 %v2191
        %2211 = vmatprep.subr.bf16.mxu0 0
        %2212 = vmatpush1.bf16.msra.mxu0 %v2190
        %2213 = vmatprep.subr.bf16.mxu0 0
        %2214 = vmatpush1.bf16.msra.mxu0 %v2189
        %2215 = vmatprep.subr.bf16.mxu0 0
        %2216 = vmatpush1.bf16.msra.mxu0 %v2188
        %2217 = vmatprep.subr.bf16.mxu0 0
        %2218 = vmatpush1.bf16.msra.mxu0 %v2187
        %2219 = vmatprep.subr.bf16.mxu0 0
        %2220 = vmatpush2.bf16.msra.mxu0 0
        %2221 = vmatprep.subr.bf16.mxu0 0
        %2222 = vmatpush2.bf16.msra.mxu0 0
        %2223 = vmatprep.subr.bf16.mxu0 0
        %2224 = vmatpush2.bf16.msra.mxu0 0
        %2225 = vmatprep.subr.bf16.mxu0 0
        %2226 = vmatpush2.bf16.msra.mxu0 0
        %2227 = vmatprep.subr.bf16.mxu0 0
        %2228 = vmatpush2.bf16.msra.mxu0 0
        %2229 = vmatprep.subr.bf16.mxu0 0
        %2230 = vmatpush2.bf16.msra.mxu0 0
        %2231 = vmatprep.subr.bf16.mxu0 0
        %2232 = vmatpush2.bf16.msra.mxu0 0
        %2233 = vmatprep.subr.bf16.mxu0 0
        %2234 = vmatpush2.bf16.msra.mxu0 0
        %2235 = vmatprep.mubr.bf16.mxu0 0
        %2236 = vmatmul.mubr.bf16.gmra.mxu0 %v2130
        %v2237 = vpop.f32.mrf.mxu0
        %v2238 = vadd.f32 %v2153, %v2237
        %v2239 = vpop.f32.mrf.mxu0
        %v2240 = vpop.f32.mrf.mxu0
        %v2241 = vadd.f32 %v2153, %v2240
        %v2242 = vpop.f32.mrf.mxu0
        %2243 = vmatprep.mubr.bf16.mxu0 0
        %2244 = vmatmul.mubr.bf16.gmra.mxu0 %v2131
        %v2245 = vpop.f32.mrf.mxu0
        %v2246 = vadd.f32 %v2153, %v2245
        %v2247 = vpop.f32.mrf.mxu0
        %v2248 = vpop.f32.mrf.mxu0
        %v2249 = vadd.f32 %v2153, %v2248
        %v2250 = vpop.f32.mrf.mxu0
        %2251 = vdwg.mxu0
        %v2252 = vadd.f32 %v1940, %v2238
        %v2253 = vadd.f32 %v1941, %v2241
        %v2254 = vadd.f32 %v1942, %v2246
        %v2255 = vadd.f32 %v1943, %v2249
        %2256 = vst.msk [vmem:[#allocation2] sm:$0xff] %vm689, %v2252
        %2257 = vst.msk [vmem:[#allocation2 + $0x8] sm:$0xff] %vm689, %v2253
        %2258 = vst.msk [vmem:[#allocation2 + $0x10] sm:$0xff] %vm689, %v2254
        %2259 = vst.msk [vmem:[#allocation2 + $0x18] sm:$0xff] %vm689, %v2255
        %p2260 = scmp.eq.s32.totalorder %s31, 1
        // Predicated region
        $region81: #{tpu_custom_call.1} parent=75 // pred_check
          %p2261 = pneg %p2260
        $region82: #{tpu_custom_call.1} parent=75 // pred_check_branch
          %2263 = sbr.rel (%p2261) target = $region84
        $region83: #{tpu_custom_call.1} parent=75 // pred_region
          %v2264 = vld [vmem:[#allocation2] sm:$0xff]
          %v2265 = vld [vmem:[#allocation2 + $0x8] sm:$0xff]
          %v2266 = vld [vmem:[#allocation2 + $0x10] sm:$0xff]
          %v2267 = vld [vmem:[#allocation2 + $0x18] sm:$0xff]
          %2268 = vst.msk [vmem:[#allocation3] sm:$0xff] %vm689, %v2264
          %2269 = vst.msk [vmem:[#allocation3 + $0x8] sm:$0xff] %vm689, %v2265
          %2270 = vst.msk [vmem:[#allocation3 + $0x10] sm:$0xff] %vm689, %v2266
          %2271 = vst.msk [vmem:[#allocation3 + $0x18] sm:$0xff] %vm689, %v2267
        $region84: #{tpu_custom_call.1} parent=75 // pred_fallthru
          _
        // Predicated region
        $region85: #{tpu_custom_call.1} parent=75 // pred_check
          %p2272 = pneg %p415
        $region86: #{tpu_custom_call.1} parent=75 // pred_check_branch
          %2274 = sbr.rel (%p2272) target = $region88
        $region87: #{tpu_custom_call.1} parent=75 // pred_region
          %s2275 = smul.u32 2, %s30
          %s2277 = ssub.s32 512, 512
          %2278 = vsyncadd [#allocation4], %s2277
          %s2279 = smul.addr %s2275, 2
          %s2280 = smul.addr %s2279, 128
          %s2281 = scalar_lea.hbm %s14, %s2280
          %s2282 = sshll.u32 [#allocation3], 4
          %s2283 = int_to_ptr.vmem [resolvable:$true] %s2282
          %2288 = dma.vmem_to_hbm [thread:$0]  %s2283, 512, %s2281, [#allocation4], 128, 128, 8
        $region88: #{tpu_custom_call.1} parent=75 // pred_fallthru
          _
        // Predicated region
        $region89: #{tpu_custom_call.1} parent=75 // pred_check
          %p2289 = pneg %p415
        $region90: #{tpu_custom_call.1} parent=75 // pred_check_branch
          %2291 = sbr.rel (%p2289) target = $region92
        $region91: #{tpu_custom_call.1} parent=75 // pred_region
          %2292 = dma.done [#allocation4], 512
        $region92: #{tpu_custom_call.1} parent=75 // pred_fallthru
          _
      $region76: #{tpu_custom_call.1} parent=5 // pred_fallthru
        _
      %p2293 = scmp.le.s32.totalorder 2, %s21
      // Predicated region
      $region93: #{tpu_custom_call.1} parent=5 // pred_check
        %p2294 = pneg %p2293
      $region94: #{tpu_custom_call.1} parent=5 // pred_check_branch
        %2296 = sbr.rel (%p2294) target = $region96
      $region95: #{tpu_custom_call.1} parent=5 // pred_region
        %s2297 = ssub.s32 %s21, 2
      $region96: #{tpu_custom_call.1} parent=5 // pred_fallthru
        _
    $region6: #{tpu_custom_call.1} parent=1 // loop_footer
      %s25 = sadd.s32 1, %s21
    $region7: #{tpu_custom_call.1} parent=1 // loop_footer_branch
      %20 = sbr.rel target = $region3
    $region8: #{tpu_custom_call.1} parent=1 // loop_exit
      _
    %2298 = vsyncpa [#allocation4], 1
    %s2299 = scalar_lea.sflag [#allocation4], 1
    %2300 = vsyncpa %s2299, 1

</llo_original>
